<compile_context>
chip_gen: v7x
topology: tpu7x:2x2x1
jax: 0.10.0
libtpu: 0.0.40
codegen_flags: <defaults>
</compile_context>

<pallas_src>
import jax
import jax.numpy as jnp
from jax import lax
from jax.experimental import pallas as pl
from jax.experimental.pallas import tpu as pltpu


# ----------------------------------------------------------------------------
# Kernel
# ----------------------------------------------------------------------------
def _sigmoid(z):
    # sigmoid(z) == 0.5 * tanh(0.5 * z) + 0.5 : one EUP intrinsic per gate.
    return jnp.tanh(z * 0.5) * 0.5 + 0.5


def _g_lstm_seq_kernel(x_ref,                  # (TT, tb, In) bf16
                       h0_ref, c0_ref,         # (tb, H)
                       wx_ref, wh_ref,         # (In, 4H), (H, 4H) bf16
                       wc_ref, wco_ref,        # (H, 2H),  (H, H)  bf16
                       b_ref,                  # (1, 4H) f32 (bco folded in)
                       h_out_ref, c_out_ref,   # (tb, H)
                       h_sc, c_sc):            # f32 VMEM carry scratch
    ti = pl.program_id(1)
    TT = x_ref.shape[0]
    H = h0_ref.shape[-1]
    mm_dtype = wx_ref.dtype

    # Load the initial state into the VMEM carry at the first time block of
    # every batch block.
    @pl.when(ti == 0)
    def _init():
        h_sc[...] = h0_ref[...].astype(jnp.float32)
        c_sc[...] = c0_ref[...].astype(jnp.float32)

    # Hoist the VMEM-resident weights out of the unrolled time loop.
    wx = wx_ref[...]
    wh = wh_ref[...]
    wc = wc_ref[...]
    wco = wco_ref[...]
    b = b_ref[...]

    def step(t, carry):
        h, c = carry                         # (tb, H) f32 carries
        x_t = x_ref[t]                       # (tb, In) bf16, dynamic lead idx

        # Gate column order of z: [input, forget, output, memory].
        z = (jnp.dot(x_t, wx, preferred_element_type=jnp.float32)
             + jnp.dot(h.astype(mm_dtype), wh, preferred_element_type=jnp.float32)
             + b)
        # c-peephole only feeds the input/forget gates.
        zc = jnp.dot(c.astype(mm_dtype), wc, preferred_element_type=jnp.float32)

        i_gate = _sigmoid(z[:, 0 * H:1 * H] + zc[:, 0 * H:1 * H])
        f_gate = _sigmoid(z[:, 1 * H:2 * H] + zc[:, 1 * H:2 * H])
        g_gate = jnp.tanh(z[:, 3 * H:4 * H])

        next_c = f_gate * c + i_gate * g_gate

        # Serial tail: the output_c peephole acts on next_c (bco pre-folded
        # into the output-gate bias column of b).
        zco = jnp.dot(next_c.astype(mm_dtype), wco,
                      preferred_element_type=jnp.float32)
        o_gate = _sigmoid(z[:, 2 * H:3 * H] + zco)
        next_h = o_gate * next_c
        return (next_h, next_c)

    h, c = lax.fori_loop(0, TT, step, (h_sc[...], c_sc[...]), unroll=True)

    # Carry state to the next time block in f32 scratch.
    h_sc[...] = h
    c_sc[...] = c

    # Write the final state once per batch block.
    @pl.when(ti == pl.num_programs(1) - 1)
    def _finalize():
        h_out_ref[...] = h.astype(h_out_ref.dtype)
        c_out_ref[...] = c.astype(c_out_ref.dtype)


# ----------------------------------------------------------------------------
# Wrappers
# ----------------------------------------------------------------------------
def g_lstm_seq(x_seq, h0, c0, fused_params, *, block_b=None, time_block=None):
    """Apply the G_LSTM cell over a whole sequence in one pallas_call.

    x_seq: (T, B, In); h0, c0: (B, H).  Returns the final (h_T, c_T).
    Each time step is exactly the PyTorch module's forward."""
    T, B, In = x_seq.shape
    H = h0.shape[-1]
    wx, wh, wc, wco, b = fused_params
    assert wx.shape == (In, 4 * H) and wh.shape == (H, 4 * H)
    assert wc.shape == (H, 2 * H) and wco.shape == (H, H) and b.shape == (1, 4 * H)
    # Lane-layout guards: gate slices z[:, k*H:(k+1)*H] must be lane-aligned.
    assert H % 128 == 0, "hidden_size must be a multiple of 128"

    if block_b is None:
        # Single-TC chips (v5e/v6e): bigger batch blocks = fewer grid steps and
        # fuller MXU rows.  On v7x keep B/block_b >= 2 so both TCs are busy.
        block_b = B if B <= 256 else 256
    assert B % block_b == 0, "B must be divisible by block_b"
    assert block_b % 8 == 0 or block_b == B, "block_b must be sublane-aligned"
    nb = B // block_b

    if time_block is None:
        time_block = next(tt for tt in (8, 4, 2, 1) if T % tt == 0)
    assert T % time_block == 0, "T must be divisible by time_block"
    nt = T // time_block

    # Cast the activations stream once on the host (halves per-step HBM DMA).
    x_bf16 = x_seq.astype(wx.dtype)

    # Constant index_map => block index never changes => Pallas fetches the
    # weights once and keeps them resident in VMEM across all grid steps.
    const = lambda shape: pl.BlockSpec(shape, lambda bi, ti: (0, 0))

    grid_spec = pltpu.PrefetchScalarGridSpec(
        num_scalar_prefetch=0,
        grid=(nb, nt),  # time innermost -> correct recurrence order per block
        in_specs=[
            pl.BlockSpec((time_block, block_b, In),
                         lambda bi, ti: (ti, bi, 0)),                 # x block
            pl.BlockSpec((block_b, H), lambda bi, ti: (bi, 0)),       # h0
            pl.BlockSpec((block_b, H), lambda bi, ti: (bi, 0)),       # c0
            const((In, 4 * H)),                                       # Wx
            const((H, 4 * H)),                                        # Wh
            const((H, 2 * H)),                                        # Wc (i,f)
            const((H, H)),                                            # Wco
            const((1, 4 * H)),                                        # b
        ],
        out_specs=[
            pl.BlockSpec((block_b, H), lambda bi, ti: (bi, 0)),       # h_T
            pl.BlockSpec((block_b, H), lambda bi, ti: (bi, 0)),       # c_T
        ],
        scratch_shapes=[
            pltpu.VMEM((block_b, H), jnp.float32),   # h carry
            pltpu.VMEM((block_b, H), jnp.float32),   # c carry
        ],
    )

    out_shape = (jax.ShapeDtypeStruct((B, H), h0.dtype),
                 jax.ShapeDtypeStruct((B, H), c0.dtype))

    return pl.pallas_call(
        _g_lstm_seq_kernel,
        out_shape=out_shape,
        grid_spec=grid_spec,
        compiler_params=pltpu.CompilerParams(
            # batch axis shards across TensorCores (v7x); time is sequential.
            dimension_semantics=("parallel", "arbitrary")),
    )(x_bf16, h0, c0, wx, wh, wc, wco, b)


def g_lstm_step(x, h, c, fused_params, *, block_b=None):
    """Single G_LSTM step (T == 1): exactly the PyTorch module forward."""
    return g_lstm_seq(x[None], h, c, fused_params,
                      block_b=block_b, time_block=1)


# ----------------------------------------------------------------------------
# Parameters (mirror the 11 nn.Linear layers of the PyTorch module)
# ----------------------------------------------------------------------------
def make_params(key, input_size, hidden_size, dtype=jnp.float32):
    """Per-gate (W, b) pairs, W stored pre-transposed as (in, out)."""
    In, H = input_size, hidden_size
    names_x = ["input_x", "forget_x", "output_x", "memory_x"]
    names_h = ["input_h", "forget_h", "output_h", "memory_h"]
    names_c = ["input_c", "forget_c", "output_c"]
    keys = iter(jax.random.split(key, 2 * (len(names_x) + len(names_h) + len(names_c))))

    def linear(in_f, out_f):
        s = 1.0 / jnp.sqrt(in_f)
        w = jax.random.uniform(next(keys), (in_f, out_f), dtype, -s, s)
        b = jax.random.uniform(next(keys), (1, out_f), dtype, -s, s)
        return w, b

    params = {}
    for n in names_x:
        params[n] = linear(In, H)
    for n in names_h + names_c:
        params[n] = linear(H, H)
    return params


def fuse_params(params, mm_dtype=jnp.bfloat16):
    """Build the split kernel weights.

    Wx (In,4H), Wh (H,4H): gate column order [input, forget, output, memory].
    Wc (H,2H): c-peephole columns for [input, forget] only.
    Wco (H,H): output_c peephole, applied to next_c inside the kernel.
    b (1,4H): bx + bh, with input_c/forget_c biases folded into the i/f
    columns and output_c's bias (bco) folded into the o column."""
    gate_x = ["input_x", "forget_x", "output_x", "memory_x"]
    gate_h = ["input_h", "forget_h", "output_h", "memory_h"]
    wx = jnp.concatenate([params[n][0] for n in gate_x], axis=1).astype(mm_dtype)
    wh = jnp.concatenate([params[n][0] for n in gate_h], axis=1).astype(mm_dtype)
    wc = jnp.concatenate([params["input_c"][0], params["forget_c"][0]],
                         axis=1).astype(mm_dtype)
    wco = params["output_c"][0].astype(mm_dtype)

    H = params["input_h"][0].shape[0]
    bx = jnp.concatenate([params[n][1] for n in gate_x], axis=1)
    bh = jnp.concatenate([params[n][1] for n in gate_h], axis=1)
    bc = jnp.concatenate([params["input_c"][1],        # -> i column
                          params["forget_c"][1],       # -> f column
                          params["output_c"][1],       # bco folded into o col
                          jnp.zeros((1, H), bx.dtype)], axis=1)
    b = (bx + bh + bc).astype(jnp.float32)             # (1, 4H)
    return wx, wh, wc, wco, b


# ----------------------------------------------------------------------------
# References
# ----------------------------------------------------------------------------
def g_lstm_reference_step(x, h, c, params, mm_dtype=jnp.float32):
    """Plain-JAX mirror of the PyTorch forward, built from the RAW per-gate
    params (independently checks the host-side weight fusion).  mm_dtype
    controls matmul input precision (bf16 to match the kernel)."""
    def lin(a, name):
        w, b = params[name]
        return jnp.dot(a.astype(mm_dtype), w.astype(mm_dtype),
                       preferred_element_type=jnp.float32) + b.astype(jnp.float32)

    i = jax.nn.sigmoid(lin(x, "input_x") + lin(h, "input_h") + lin(c, "input_c"))
    f = jax.nn.sigmoid(lin(x, "forget_x") + lin(h, "forget_h") + lin(c, "forget_c"))
    g = jnp.tanh(lin(x, "memory_x") + lin(h, "memory_h"))
    next_c = f * c + i * g
    o = jax.nn.sigmoid(lin(x, "output_x") + lin(h, "output_h")
                       + lin(next_c, "output_c"))
    next_h = o * next_c
    return next_h, next_c


def g_lstm_reference_seq(x_seq, h0, c0, params, mm_dtype=jnp.float32):
    h, c = h0, c0
    for t in range(x_seq.shape[0]):
        h, c = g_lstm_reference_step(x_seq[t], h, c, params, mm_dtype=mm_dtype)
    return h, c


# ----------------------------------------------------------------------------
# Demo / correctness check
# ----------------------------------------------------------------------------
if __name__ == "__main__":
    # Small, tile-aligned shapes consistent with the module's forward:
    # x_t: (B, input_size), h/c: (B, hidden_size); T steps of the recurrence.
    T, B, INPUT_SIZE, HIDDEN_SIZE = 8, 16, 128, 128
    TIME_BLOCK = 4   # recurrence steps per grid iteration

    key = jax.random.PRNGKey(0)
    kx, kh, kc, kp = jax.random.split(key, 4)

    x_seq = jax.random.normal(kx, (T, B, INPUT_SIZE), jnp.float32)
    h0 = jax.random.normal(kh, (B, HIDDEN_SIZE), jnp.float32)
    c0 = jax.random.normal(kc, (B, HIDDEN_SIZE), jnp.float32)

    params = make_params(kp, INPUT_SIZE, HIDDEN_SIZE)
    fused = fuse_params(params, mm_dtype=jnp.bfloat16)

    # Full-sequence fused kernel (time loop inside one pallas_call).
    h_T, c_T = g_lstm_seq(x_seq, h0, c0, fused, time_block=TIME_BLOCK)
    jax.block_until_ready((h_T, c_T))

    # Matched-precision reference (bf16 matmul inputs, f32 accumulation/gates).
    h_ref, c_ref = g_lstm_reference_seq(x_seq, h0, c0, params,
                                        mm_dtype=jnp.bfloat16)
    assert jnp.allclose(h_T, h_ref, atol=2e-3, rtol=2e-3), "h mismatch (seq)"
    assert jnp.allclose(c_T, c_ref, atol=2e-3, rtol=2e-3), "c mismatch (seq)"

    # Informational: distance to exact f32 module math (bf16 weights introduce
    # ~1e-2-level relative error over long sequences; documented, not asserted).
    h_f32, c_f32 = g_lstm_reference_seq(x_seq, h0, c0, params,
                                        mm_dtype=jnp.float32)
    _max_f32_diff = float(jnp.max(jnp.abs(h_T - h_f32)))

    # Single-step path (T == 1): exactly one PyTorch-module forward.
    h1, c1 = g_lstm_step(x_seq[0], h0, c0, fused)
    h1_ref, c1_ref = g_lstm_reference_step(x_seq[0], h0, c0, params,
                                           mm_dtype=jnp.bfloat16)
    jax.block_until_ready((h1, c1))
    assert jnp.allclose(h1, h1_ref, atol=2e-3, rtol=2e-3), "h mismatch (step)"
    assert jnp.allclose(c1, c1_ref, atol=2e-3, rtol=2e-3), "c mismatch (step)"

    # TODO(synk): for very long T / large H, a further split (precompute
    # Zx = x_seq @ Wx as one big parallel matmul, stream it into the
    # recurrent kernel) would take ~half the serial MXU work off the
    # recurrence's critical path.

    print("KERNEL_OK")
</pallas_src>

<mosaic_0001>
module attributes {stable_mosaic.version = 11 : i64} {
  func.func @_g_lstm_seq_kernel(%arg0: i32, %arg1: i32, %arg2: memref<4x16x128xbf16, #tpu.memory_space<vmem>>, %arg3: memref<16x128xf32, #tpu.memory_space<vmem>>, %arg4: memref<16x128xf32, #tpu.memory_space<vmem>>, %arg5: memref<128x512xbf16, #tpu.memory_space<vmem>>, %arg6: memref<128x512xbf16, #tpu.memory_space<vmem>>, %arg7: memref<128x256xbf16, #tpu.memory_space<vmem>>, %arg8: memref<128x128xbf16, #tpu.memory_space<vmem>>, %arg9: memref<1x512xf32, #tpu.memory_space<vmem>>, %arg10: memref<16x128xf32, #tpu.memory_space<vmem>>, %arg11: memref<16x128xf32, #tpu.memory_space<vmem>>, %arg12: memref<16x128xf32, #tpu.memory_space<vmem>>, %arg13: memref<16x128xf32, #tpu.memory_space<vmem>>) attributes {dimension_semantics = [#tpu.dimension_semantics<parallel>, #tpu.dimension_semantics<arbitrary>], iteration_bounds = array<i64: 1, 2>, scalar_prefetch = 0 : i64, scratch_operands = 2 : i64, tpu.core_type = #tpu.core_type<tc>, window_params = [{transform_indices = @transform_0, window_bounds = array<i64: 4, 16, 128>}, {transform_indices = @transform_1, window_bounds = array<i64: 16, 128>}, {transform_indices = @transform_2, window_bounds = array<i64: 16, 128>}, {pipeline_mode = #tpu.pipeline_mode<synchronous>, transform_indices = @transform_3, window_bounds = array<i64: 128, 512>}, {pipeline_mode = #tpu.pipeline_mode<synchronous>, transform_indices = @transform_4, window_bounds = array<i64: 128, 512>}, {pipeline_mode = #tpu.pipeline_mode<synchronous>, transform_indices = @transform_5, window_bounds = array<i64: 128, 256>}, {pipeline_mode = #tpu.pipeline_mode<synchronous>, transform_indices = @transform_6, window_bounds = array<i64: 128, 128>}, {pipeline_mode = #tpu.pipeline_mode<synchronous>, transform_indices = @transform_7, window_bounds = array<i64: 1, 512>}, {transform_indices = @transform_8, window_bounds = array<i64: 16, 128>}, {transform_indices = @transform_9, window_bounds = array<i64: 16, 128>}]} {
    %c0_i32 = arith.constant 0 : i32
    %0 = arith.cmpi eq, %arg1, %c0_i32 : i32
    %1 = arith.extui %0 : i1 to i32
    %c0_i32_0 = arith.constant 0 : i32
    %2 = arith.cmpi ne, %1, %c0_i32_0 : i32
    scf.if %2 {
      %c0_80 = arith.constant 0 : index
      %c0_81 = arith.constant 0 : index
      %207 = vector.load %arg3[%c0_80, %c0_81] : memref<16x128xf32, #tpu.memory_space<vmem>>, vector<16x128xf32>
      %c0_82 = arith.constant 0 : index
      %c0_83 = arith.constant 0 : index
      %208 = vector.load %arg12[%c0_82, %c0_83] : memref<16x128xf32, #tpu.memory_space<vmem>>, vector<16x128xf32>
      tpu.vector_store %arg12[%c0_82, %c0_83], %207 {strides = array<i32>} : memref<16x128xf32, #tpu.memory_space<vmem>>, vector<16x128xf32>,
      %c0_84 = arith.constant 0 : index
      %c0_85 = arith.constant 0 : index
      %209 = vector.load %arg4[%c0_84, %c0_85] : memref<16x128xf32, #tpu.memory_space<vmem>>, vector<16x128xf32>
      %c0_86 = arith.constant 0 : index
      %c0_87 = arith.constant 0 : index
      %210 = vector.load %arg13[%c0_86, %c0_87] : memref<16x128xf32, #tpu.memory_space<vmem>>, vector<16x128xf32>
      tpu.vector_store %arg13[%c0_86, %c0_87], %209 {strides = array<i32>} : memref<16x128xf32, #tpu.memory_space<vmem>>, vector<16x128xf32>,
    } else {
    }
    %c0 = arith.constant 0 : index
    %c0_1 = arith.constant 0 : index
    %3 = vector.load %arg5[%c0, %c0_1] : memref<128x512xbf16, #tpu.memory_space<vmem>>, vector<128x512xbf16>
    %c0_2 = arith.constant 0 : index
    %c0_3 = arith.constant 0 : index
    %4 = vector.load %arg6[%c0_2, %c0_3] : memref<128x512xbf16, #tpu.memory_space<vmem>>, vector<128x512xbf16>
    %c0_4 = arith.constant 0 : index
    %c0_5 = arith.constant 0 : index
    %5 = vector.load %arg7[%c0_4, %c0_5] : memref<128x256xbf16, #tpu.memory_space<vmem>>, vector<128x256xbf16>
    %c0_6 = arith.constant 0 : index
    %c0_7 = arith.constant 0 : index
    %6 = vector.load %arg8[%c0_6, %c0_7] : memref<128x128xbf16, #tpu.memory_space<vmem>>, vector<128x128xbf16>
    %c0_8 = arith.constant 0 : index
    %c0_9 = arith.constant 0 : index
    %7 = vector.load %arg9[%c0_8, %c0_9] : memref<1x512xf32, #tpu.memory_space<vmem>>, vector<1x512xf32>
    %c0_10 = arith.constant 0 : index
    %c0_11 = arith.constant 0 : index
    %8 = vector.load %arg12[%c0_10, %c0_11] : memref<16x128xf32, #tpu.memory_space<vmem>>, vector<16x128xf32>
    %c0_12 = arith.constant 0 : index
    %c0_13 = arith.constant 0 : index
    %9 = vector.load %arg13[%c0_12, %c0_13] : memref<16x128xf32, #tpu.memory_space<vmem>>, vector<16x128xf32>
    %c0_i32_14 = arith.constant 0 : i32
    %10 = arith.index_cast %c0_i32_14 : i32 to index
    %c0_15 = arith.constant 0 : index
    %c0_16 = arith.constant 0 : index
    %11 = vector.load %arg2[%10, %c0_15, %c0_16] : memref<4x16x128xbf16, #tpu.memory_space<vmem>>, vector<1x16x128xbf16>
    %12 = vector.shape_cast %11 : vector<1x16x128xbf16> to vector<16x128xbf16>
    %cst = arith.constant dense<0.000000e+00> : vector<16x512xf32>
    %13 = tpu.matmul %12, %3, %cst {dimension_numbers = #tpu.dot_dimension_numbers<[1], [0], [0], [1], [0, 0, 1, 1], [], []>} : vector<16x128xbf16>, vector<128x512xbf16>, vector<16x512xf32> -> vector<16x512xf32>
    %14 = arith.truncf %8 : vector<16x128xf32> to vector<16x128xbf16>
    %cst_17 = arith.constant dense<0.000000e+00> : vector<16x512xf32>
    %15 = tpu.matmul %14, %4, %cst_17 {dimension_numbers = #tpu.dot_dimension_numbers<[1], [0], [0], [1], [0, 0, 1, 1], [], []>} : vector<16x128xbf16>, vector<128x512xbf16>, vector<16x512xf32> -> vector<16x512xf32>
    %16 = arith.addf %13, %15 : vector<16x512xf32>
    %17 = vector.broadcast %7 : vector<1x512xf32> to vector<16x512xf32>
    %18 = arith.addf %16, %17 : vector<16x512xf32>
    %19 = arith.truncf %9 : vector<16x128xf32> to vector<16x128xbf16>
    %cst_18 = arith.constant dense<0.000000e+00> : vector<16x256xf32>
    %20 = tpu.matmul %19, %5, %cst_18 {dimension_numbers = #tpu.dot_dimension_numbers<[1], [0], [0], [1], [0, 0, 1, 1], [], []>} : vector<16x128xbf16>, vector<128x256xbf16>, vector<16x256xf32> -> vector<16x256xf32>
    %21 = vector.extract_strided_slice %18 {offsets = [0, 0], sizes = [16, 128], strides = [1, 1]} : vector<16x512xf32> to vector<16x128xf32>
    %22 = vector.extract_strided_slice %20 {offsets = [0, 0], sizes = [16, 128], strides = [1, 1]} : vector<16x256xf32> to vector<16x128xf32>
    %23 = arith.addf %21, %22 : vector<16x128xf32>
    %cst_19 = arith.constant 5.000000e-01 : f32
    %24 = vector.broadcast %cst_19 : f32 to vector<16x128xf32>
    %25 = arith.mulf %23, %24 : vector<16x128xf32>
    %26 = math.tanh %25 : vector<16x128xf32>
    %cst_20 = arith.constant 5.000000e-01 : f32
    %27 = vector.broadcast %cst_20 : f32 to vector<16x128xf32>
    %28 = arith.mulf %26, %27 : vector<16x128xf32>
    %cst_21 = arith.constant 5.000000e-01 : f32
    %29 = vector.broadcast %cst_21 : f32 to vector<16x128xf32>
    %30 = arith.addf %28, %29 : vector<16x128xf32>
    %31 = vector.extract_strided_slice %18 {offsets = [0, 128], sizes = [16, 128], strides = [1, 1]} : vector<16x512xf32> to vector<16x128xf32>
    %32 = vector.extract_strided_slice %20 {offsets = [0, 128], sizes = [16, 128], strides = [1, 1]} : vector<16x256xf32> to vector<16x128xf32>
    %33 = arith.addf %31, %32 : vector<16x128xf32>
    %cst_22 = arith.constant 5.000000e-01 : f32
    %34 = vector.broadcast %cst_22 : f32 to vector<16x128xf32>
    %35 = arith.mulf %33, %34 : vector<16x128xf32>
    %36 = math.tanh %35 : vector<16x128xf32>
    %cst_23 = arith.constant 5.000000e-01 : f32
    %37 = vector.broadcast %cst_23 : f32 to vector<16x128xf32>
    %38 = arith.mulf %36, %37 : vector<16x128xf32>
    %cst_24 = arith.constant 5.000000e-01 : f32
    %39 = vector.broadcast %cst_24 : f32 to vector<16x128xf32>
    %40 = arith.addf %38, %39 : vector<16x128xf32>
    %41 = vector.extract_strided_slice %18 {offsets = [0, 384], sizes = [16, 128], strides = [1, 1]} : vector<16x512xf32> to vector<16x128xf32>
    %42 = math.tanh %41 : vector<16x128xf32>
    %43 = arith.mulf %40, %9 : vector<16x128xf32>
    %44 = arith.mulf %30, %42 : vector<16x128xf32>
    %45 = arith.addf %43, %44 : vector<16x128xf32>
    %46 = arith.truncf %45 : vector<16x128xf32> to vector<16x128xbf16>
    %cst_25 = arith.constant dense<0.000000e+00> : vector<16x128xf32>
    %47 = tpu.matmul %46, %6, %cst_25 {dimension_numbers = #tpu.dot_dimension_numbers<[1], [0], [0], [1], [0, 0, 1, 1], [], []>} : vector<16x128xbf16>, vector<128x128xbf16>, vector<16x128xf32> -> vector<16x128xf32>
    %48 = vector.extract_strided_slice %18 {offsets = [0, 256], sizes = [16, 128], strides = [1, 1]} : vector<16x512xf32> to vector<16x128xf32>
    %49 = arith.addf %48, %47 : vector<16x128xf32>
    %cst_26 = arith.constant 5.000000e-01 : f32
    %50 = vector.broadcast %cst_26 : f32 to vector<16x128xf32>
    %51 = arith.mulf %49, %50 : vector<16x128xf32>
    %52 = math.tanh %51 : vector<16x128xf32>
    %cst_27 = arith.constant 5.000000e-01 : f32
    %53 = vector.broadcast %cst_27 : f32 to vector<16x128xf32>
    %54 = arith.mulf %52, %53 : vector<16x128xf32>
    %cst_28 = arith.constant 5.000000e-01 : f32
    %55 = vector.broadcast %cst_28 : f32 to vector<16x128xf32>
    %56 = arith.addf %54, %55 : vector<16x128xf32>
    %57 = arith.mulf %56, %45 : vector<16x128xf32>
    %c1_i32 = arith.constant 1 : i32
    %58 = arith.index_cast %c1_i32 : i32 to index
    %c0_29 = arith.constant 0 : index
    %c0_30 = arith.constant 0 : index
    %59 = vector.load %arg2[%58, %c0_29, %c0_30] : memref<4x16x128xbf16, #tpu.memory_space<vmem>>, vector<1x16x128xbf16>
    %60 = vector.shape_cast %59 : vector<1x16x128xbf16> to vector<16x128xbf16>
    %cst_31 = arith.constant dense<0.000000e+00> : vector<16x512xf32>
    %61 = tpu.matmul %60, %3, %cst_31 {dimension_numbers = #tpu.dot_dimension_numbers<[1], [0], [0], [1], [0, 0, 1, 1], [], []>} : vector<16x128xbf16>, vector<128x512xbf16>, vector<16x512xf32> -> vector<16x512xf32>
    %62 = arith.truncf %57 : vector<16x128xf32> to vector<16x128xbf16>
    %cst_32 = arith.constant dense<0.000000e+00> : vector<16x512xf32>
    %63 = tpu.matmul %62, %4, %cst_32 {dimension_numbers = #tpu.dot_dimension_numbers<[1], [0], [0], [1], [0, 0, 1, 1], [], []>} : vector<16x128xbf16>, vector<128x512xbf16>, vector<16x512xf32> -> vector<16x512xf32>
    %64 = arith.addf %61, %63 : vector<16x512xf32>
    %65 = vector.broadcast %7 : vector<1x512xf32> to vector<16x512xf32>
    %66 = arith.addf %64, %65 : vector<16x512xf32>
    %67 = arith.truncf %45 : vector<16x128xf32> to vector<16x128xbf16>
    %cst_33 = arith.constant dense<0.000000e+00> : vector<16x256xf32>
    %68 = tpu.matmul %67, %5, %cst_33 {dimension_numbers = #tpu.dot_dimension_numbers<[1], [0], [0], [1], [0, 0, 1, 1], [], []>} : vector<16x128xbf16>, vector<128x256xbf16>, vector<16x256xf32> -> vector<16x256xf32>
    %69 = vector.extract_strided_slice %66 {offsets = [0, 0], sizes = [16, 128], strides = [1, 1]} : vector<16x512xf32> to vector<16x128xf32>
    %70 = vector.extract_strided_slice %68 {offsets = [0, 0], sizes = [16, 128], strides = [1, 1]} : vector<16x256xf32> to vector<16x128xf32>
    %71 = arith.addf %69, %70 : vector<16x128xf32>
    %cst_34 = arith.constant 5.000000e-01 : f32
    %72 = vector.broadcast %cst_34 : f32 to vector<16x128xf32>
    %73 = arith.mulf %71, %72 : vector<16x128xf32>
    %74 = math.tanh %73 : vector<16x128xf32>
    %cst_35 = arith.constant 5.000000e-01 : f32
    %75 = vector.broadcast %cst_35 : f32 to vector<16x128xf32>
    %76 = arith.mulf %74, %75 : vector<16x128xf32>
    %cst_36 = arith.constant 5.000000e-01 : f32
    %77 = vector.broadcast %cst_36 : f32 to vector<16x128xf32>
    %78 = arith.addf %76, %77 : vector<16x128xf32>
    %79 = vector.extract_strided_slice %66 {offsets = [0, 128], sizes = [16, 128], strides = [1, 1]} : vector<16x512xf32> to vector<16x128xf32>
    %80 = vector.extract_strided_slice %68 {offsets = [0, 128], sizes = [16, 128], strides = [1, 1]} : vector<16x256xf32> to vector<16x128xf32>
    %81 = arith.addf %79, %80 : vector<16x128xf32>
    %cst_37 = arith.constant 5.000000e-01 : f32
    %82 = vector.broadcast %cst_37 : f32 to vector<16x128xf32>
    %83 = arith.mulf %81, %82 : vector<16x128xf32>
    %84 = math.tanh %83 : vector<16x128xf32>
    %cst_38 = arith.constant 5.000000e-01 : f32
    %85 = vector.broadcast %cst_38 : f32 to vector<16x128xf32>
    %86 = arith.mulf %84, %85 : vector<16x128xf32>
    %cst_39 = arith.constant 5.000000e-01 : f32
    %87 = vector.broadcast %cst_39 : f32 to vector<16x128xf32>
    %88 = arith.addf %86, %87 : vector<16x128xf32>
    %89 = vector.extract_strided_slice %66 {offsets = [0, 384], sizes = [16, 128], strides = [1, 1]} : vector<16x512xf32> to vector<16x128xf32>
    %90 = math.tanh %89 : vector<16x128xf32>
    %91 = arith.mulf %88, %45 : vector<16x128xf32>
    %92 = arith.mulf %78, %90 : vector<16x128xf32>
    %93 = arith.addf %91, %92 : vector<16x128xf32>
    %94 = arith.truncf %93 : vector<16x128xf32> to vector<16x128xbf16>
    %cst_40 = arith.constant dense<0.000000e+00> : vector<16x128xf32>
    %95 = tpu.matmul %94, %6, %cst_40 {dimension_numbers = #tpu.dot_dimension_numbers<[1], [0], [0], [1], [0, 0, 1, 1], [], []>} : vector<16x128xbf16>, vector<128x128xbf16>, vector<16x128xf32> -> vector<16x128xf32>
    %96 = vector.extract_strided_slice %66 {offsets = [0, 256], sizes = [16, 128], strides = [1, 1]} : vector<16x512xf32> to vector<16x128xf32>
    %97 = arith.addf %96, %95 : vector<16x128xf32>
    %cst_41 = arith.constant 5.000000e-01 : f32
    %98 = vector.broadcast %cst_41 : f32 to vector<16x128xf32>
    %99 = arith.mulf %97, %98 : vector<16x128xf32>
    %100 = math.tanh %99 : vector<16x128xf32>
    %cst_42 = arith.constant 5.000000e-01 : f32
    %101 = vector.broadcast %cst_42 : f32 to vector<16x128xf32>
    %102 = arith.mulf %100, %101 : vector<16x128xf32>
    %cst_43 = arith.constant 5.000000e-01 : f32
    %103 = vector.broadcast %cst_43 : f32 to vector<16x128xf32>
    %104 = arith.addf %102, %103 : vector<16x128xf32>
    %105 = arith.mulf %104, %93 : vector<16x128xf32>
    %c2_i32 = arith.constant 2 : i32
    %106 = arith.index_cast %c2_i32 : i32 to index
    %c0_44 = arith.constant 0 : index
    %c0_45 = arith.constant 0 : index
    %107 = vector.load %arg2[%106, %c0_44, %c0_45] : memref<4x16x128xbf16, #tpu.memory_space<vmem>>, vector<1x16x128xbf16>
    %108 = vector.shape_cast %107 : vector<1x16x128xbf16> to vector<16x128xbf16>
    %cst_46 = arith.constant dense<0.000000e+00> : vector<16x512xf32>
    %109 = tpu.matmul %108, %3, %cst_46 {dimension_numbers = #tpu.dot_dimension_numbers<[1], [0], [0], [1], [0, 0, 1, 1], [], []>} : vector<16x128xbf16>, vector<128x512xbf16>, vector<16x512xf32> -> vector<16x512xf32>
    %110 = arith.truncf %105 : vector<16x128xf32> to vector<16x128xbf16>
    %cst_47 = arith.constant dense<0.000000e+00> : vector<16x512xf32>
    %111 = tpu.matmul %110, %4, %cst_47 {dimension_numbers = #tpu.dot_dimension_numbers<[1], [0], [0], [1], [0, 0, 1, 1], [], []>} : vector<16x128xbf16>, vector<128x512xbf16>, vector<16x512xf32> -> vector<16x512xf32>
    %112 = arith.addf %109, %111 : vector<16x512xf32>
    %113 = vector.broadcast %7 : vector<1x512xf32> to vector<16x512xf32>
    %114 = arith.addf %112, %113 : vector<16x512xf32>
    %115 = arith.truncf %93 : vector<16x128xf32> to vector<16x128xbf16>
    %cst_48 = arith.constant dense<0.000000e+00> : vector<16x256xf32>
    %116 = tpu.matmul %115, %5, %cst_48 {dimension_numbers = #tpu.dot_dimension_numbers<[1], [0], [0], [1], [0, 0, 1, 1], [], []>} : vector<16x128xbf16>, vector<128x256xbf16>, vector<16x256xf32> -> vector<16x256xf32>
    %117 = vector.extract_strided_slice %114 {offsets = [0, 0], sizes = [16, 128], strides = [1, 1]} : vector<16x512xf32> to vector<16x128xf32>
    %118 = vector.extract_strided_slice %116 {offsets = [0, 0], sizes = [16, 128], strides = [1, 1]} : vector<16x256xf32> to vector<16x128xf32>
    %119 = arith.addf %117, %118 : vector<16x128xf32>
    %cst_49 = arith.constant 5.000000e-01 : f32
    %120 = vector.broadcast %cst_49 : f32 to vector<16x128xf32>
    %121 = arith.mulf %119, %120 : vector<16x128xf32>
    %122 = math.tanh %121 : vector<16x128xf32>
    %cst_50 = arith.constant 5.000000e-01 : f32
    %123 = vector.broadcast %cst_50 : f32 to vector<16x128xf32>
    %124 = arith.mulf %122, %123 : vector<16x128xf32>
    %cst_51 = arith.constant 5.000000e-01 : f32
    %125 = vector.broadcast %cst_51 : f32 to vector<16x128xf32>
    %126 = arith.addf %124, %125 : vector<16x128xf32>
    %127 = vector.extract_strided_slice %114 {offsets = [0, 128], sizes = [16, 128], strides = [1, 1]} : vector<16x512xf32> to vector<16x128xf32>
    %128 = vector.extract_strided_slice %116 {offsets = [0, 128], sizes = [16, 128], strides = [1, 1]} : vector<16x256xf32> to vector<16x128xf32>
    %129 = arith.addf %127, %128 : vector<16x128xf32>
    %cst_52 = arith.constant 5.000000e-01 : f32
    %130 = vector.broadcast %cst_52 : f32 to vector<16x128xf32>
    %131 = arith.mulf %129, %130 : vector<16x128xf32>
    %132 = math.tanh %131 : vector<16x128xf32>
    %cst_53 = arith.constant 5.000000e-01 : f32
    %133 = vector.broadcast %cst_53 : f32 to vector<16x128xf32>
    %134 = arith.mulf %132, %133 : vector<16x128xf32>
    %cst_54 = arith.constant 5.000000e-01 : f32
    %135 = vector.broadcast %cst_54 : f32 to vector<16x128xf32>
    %136 = arith.addf %134, %135 : vector<16x128xf32>
    %137 = vector.extract_strided_slice %114 {offsets = [0, 384], sizes = [16, 128], strides = [1, 1]} : vector<16x512xf32> to vector<16x128xf32>
    %138 = math.tanh %137 : vector<16x128xf32>
    %139 = arith.mulf %136, %93 : vector<16x128xf32>
    %140 = arith.mulf %126, %138 : vector<16x128xf32>
    %141 = arith.addf %139, %140 : vector<16x128xf32>
    %142 = arith.truncf %141 : vector<16x128xf32> to vector<16x128xbf16>
    %cst_55 = arith.constant dense<0.000000e+00> : vector<16x128xf32>
    %143 = tpu.matmul %142, %6, %cst_55 {dimension_numbers = #tpu.dot_dimension_numbers<[1], [0], [0], [1], [0, 0, 1, 1], [], []>} : vector<16x128xbf16>, vector<128x128xbf16>, vector<16x128xf32> -> vector<16x128xf32>
    %144 = vector.extract_strided_slice %114 {offsets = [0, 256], sizes = [16, 128], strides = [1, 1]} : vector<16x512xf32> to vector<16x128xf32>
    %145 = arith.addf %144, %143 : vector<16x128xf32>
    %cst_56 = arith.constant 5.000000e-01 : f32
    %146 = vector.broadcast %cst_56 : f32 to vector<16x128xf32>
    %147 = arith.mulf %145, %146 : vector<16x128xf32>
    %148 = math.tanh %147 : vector<16x128xf32>
    %cst_57 = arith.constant 5.000000e-01 : f32
    %149 = vector.broadcast %cst_57 : f32 to vector<16x128xf32>
    %150 = arith.mulf %148, %149 : vector<16x128xf32>
    %cst_58 = arith.constant 5.000000e-01 : f32
    %151 = vector.broadcast %cst_58 : f32 to vector<16x128xf32>
    %152 = arith.addf %150, %151 : vector<16x128xf32>
    %153 = arith.mulf %152, %141 : vector<16x128xf32>
    %c3_i32 = arith.constant 3 : i32
    %154 = arith.index_cast %c3_i32 : i32 to index
    %c0_59 = arith.constant 0 : index
    %c0_60 = arith.constant 0 : index
    %155 = vector.load %arg2[%154, %c0_59, %c0_60] : memref<4x16x128xbf16, #tpu.memory_space<vmem>>, vector<1x16x128xbf16>
    %156 = vector.shape_cast %155 : vector<1x16x128xbf16> to vector<16x128xbf16>
    %cst_61 = arith.constant dense<0.000000e+00> : vector<16x512xf32>
    %157 = tpu.matmul %156, %3, %cst_61 {dimension_numbers = #tpu.dot_dimension_numbers<[1], [0], [0], [1], [0, 0, 1, 1], [], []>} : vector<16x128xbf16>, vector<128x512xbf16>, vector<16x512xf32> -> vector<16x512xf32>
    %158 = arith.truncf %153 : vector<16x128xf32> to vector<16x128xbf16>
    %cst_62 = arith.constant dense<0.000000e+00> : vector<16x512xf32>
    %159 = tpu.matmul %158, %4, %cst_62 {dimension_numbers = #tpu.dot_dimension_numbers<[1], [0], [0], [1], [0, 0, 1, 1], [], []>} : vector<16x128xbf16>, vector<128x512xbf16>, vector<16x512xf32> -> vector<16x512xf32>
    %160 = arith.addf %157, %159 : vector<16x512xf32>
    %161 = vector.broadcast %7 : vector<1x512xf32> to vector<16x512xf32>
    %162 = arith.addf %160, %161 : vector<16x512xf32>
    %163 = arith.truncf %141 : vector<16x128xf32> to vector<16x128xbf16>
    %cst_63 = arith.constant dense<0.000000e+00> : vector<16x256xf32>
    %164 = tpu.matmul %163, %5, %cst_63 {dimension_numbers = #tpu.dot_dimension_numbers<[1], [0], [0], [1], [0, 0, 1, 1], [], []>} : vector<16x128xbf16>, vector<128x256xbf16>, vector<16x256xf32> -> vector<16x256xf32>
    %165 = vector.extract_strided_slice %162 {offsets = [0, 0], sizes = [16, 128], strides = [1, 1]} : vector<16x512xf32> to vector<16x128xf32>
    %166 = vector.extract_strided_slice %164 {offsets = [0, 0], sizes = [16, 128], strides = [1, 1]} : vector<16x256xf32> to vector<16x128xf32>
    %167 = arith.addf %165, %166 : vector<16x128xf32>
    %cst_64 = arith.constant 5.000000e-01 : f32
    %168 = vector.broadcast %cst_64 : f32 to vector<16x128xf32>
    %169 = arith.mulf %167, %168 : vector<16x128xf32>
    %170 = math.tanh %169 : vector<16x128xf32>
    %cst_65 = arith.constant 5.000000e-01 : f32
    %171 = vector.broadcast %cst_65 : f32 to vector<16x128xf32>
    %172 = arith.mulf %170, %171 : vector<16x128xf32>
    %cst_66 = arith.constant 5.000000e-01 : f32
    %173 = vector.broadcast %cst_66 : f32 to vector<16x128xf32>
    %174 = arith.addf %172, %173 : vector<16x128xf32>
    %175 = vector.extract_strided_slice %162 {offsets = [0, 128], sizes = [16, 128], strides = [1, 1]} : vector<16x512xf32> to vector<16x128xf32>
    %176 = vector.extract_strided_slice %164 {offsets = [0, 128], sizes = [16, 128], strides = [1, 1]} : vector<16x256xf32> to vector<16x128xf32>
    %177 = arith.addf %175, %176 : vector<16x128xf32>
    %cst_67 = arith.constant 5.000000e-01 : f32
    %178 = vector.broadcast %cst_67 : f32 to vector<16x128xf32>
    %179 = arith.mulf %177, %178 : vector<16x128xf32>
    %180 = math.tanh %179 : vector<16x128xf32>
    %cst_68 = arith.constant 5.000000e-01 : f32
    %181 = vector.broadcast %cst_68 : f32 to vector<16x128xf32>
    %182 = arith.mulf %180, %181 : vector<16x128xf32>
    %cst_69 = arith.constant 5.000000e-01 : f32
    %183 = vector.broadcast %cst_69 : f32 to vector<16x128xf32>
    %184 = arith.addf %182, %183 : vector<16x128xf32>
    %185 = vector.extract_strided_slice %162 {offsets = [0, 384], sizes = [16, 128], strides = [1, 1]} : vector<16x512xf32> to vector<16x128xf32>
    %186 = math.tanh %185 : vector<16x128xf32>
    %187 = arith.mulf %184, %141 : vector<16x128xf32>
    %188 = arith.mulf %174, %186 : vector<16x128xf32>
    %189 = arith.addf %187, %188 : vector<16x128xf32>
    %190 = arith.truncf %189 : vector<16x128xf32> to vector<16x128xbf16>
    %cst_70 = arith.constant dense<0.000000e+00> : vector<16x128xf32>
    %191 = tpu.matmul %190, %6, %cst_70 {dimension_numbers = #tpu.dot_dimension_numbers<[1], [0], [0], [1], [0, 0, 1, 1], [], []>} : vector<16x128xbf16>, vector<128x128xbf16>, vector<16x128xf32> -> vector<16x128xf32>
    %192 = vector.extract_strided_slice %162 {offsets = [0, 256], sizes = [16, 128], strides = [1, 1]} : vector<16x512xf32> to vector<16x128xf32>
    %193 = arith.addf %192, %191 : vector<16x128xf32>
    %cst_71 = arith.constant 5.000000e-01 : f32
    %194 = vector.broadcast %cst_71 : f32 to vector<16x128xf32>
    %195 = arith.mulf %193, %194 : vector<16x128xf32>
    %196 = math.tanh %195 : vector<16x128xf32>
    %cst_72 = arith.constant 5.000000e-01 : f32
    %197 = vector.broadcast %cst_72 : f32 to vector<16x128xf32>
    %198 = arith.mulf %196, %197 : vector<16x128xf32>
    %cst_73 = arith.constant 5.000000e-01 : f32
    %199 = vector.broadcast %cst_73 : f32 to vector<16x128xf32>
    %200 = arith.addf %198, %199 : vector<16x128xf32>
    %201 = arith.mulf %200, %189 : vector<16x128xf32>
    %c4_i32 = arith.constant 4 : i32
    %c0_74 = arith.constant 0 : index
    %c0_75 = arith.constant 0 : index
    %202 = vector.load %arg12[%c0_74, %c0_75] : memref<16x128xf32, #tpu.memory_space<vmem>>, vector<16x128xf32>
    tpu.vector_store %arg12[%c0_74, %c0_75], %201 {strides = array<i32>} : memref<16x128xf32, #tpu.memory_space<vmem>>, vector<16x128xf32>,
    %c0_76 = arith.constant 0 : index
    %c0_77 = arith.constant 0 : index
    %203 = vector.load %arg13[%c0_76, %c0_77] : memref<16x128xf32, #tpu.memory_space<vmem>>, vector<16x128xf32>
    tpu.vector_store %arg13[%c0_76, %c0_77], %189 {strides = array<i32>} : memref<16x128xf32, #tpu.memory_space<vmem>>, vector<16x128xf32>,
    %c1_i32_78 = arith.constant 1 : i32
    %204 = arith.cmpi eq, %arg1, %c1_i32_78 : i32
    %205 = arith.extui %204 : i1 to i32
    %c0_i32_79 = arith.constant 0 : i32
    %206 = arith.cmpi ne, %205, %c0_i32_79 : i32
    scf.if %206 {
      %c0_80 = arith.constant 0 : index
      %c0_81 = arith.constant 0 : index
      %207 = vector.load %arg10[%c0_80, %c0_81] : memref<16x128xf32, #tpu.memory_space<vmem>>, vector<16x128xf32>
      tpu.vector_store %arg10[%c0_80, %c0_81], %201 {strides = array<i32>} : memref<16x128xf32, #tpu.memory_space<vmem>>, vector<16x128xf32>,
      %c0_82 = arith.constant 0 : index
      %c0_83 = arith.constant 0 : index
      %208 = vector.load %arg11[%c0_82, %c0_83] : memref<16x128xf32, #tpu.memory_space<vmem>>, vector<16x128xf32>
      tpu.vector_store %arg11[%c0_82, %c0_83], %189 {strides = array<i32>} : memref<16x128xf32, #tpu.memory_space<vmem>>, vector<16x128xf32>,
    } else {
    }
    return
  }
  func.func @transform_0(%arg0: i32, %arg1: i32) -> (i32, i32, i32) {
    %c0_i32 = arith.constant 0 : i32
    %c0_i32_0 = arith.constant 0 : i32
    return %arg1, %arg0, %c0_i32 : i32, i32, i32
  }
  func.func @transform_1(%arg0: i32, %arg1: i32) -> (i32, i32) {
    %c0_i32 = arith.constant 0 : i32
    %c0_i32_0 = arith.constant 0 : i32
    return %arg0, %c0_i32 : i32, i32
  }
  func.func @transform_2(%arg0: i32, %arg1: i32) -> (i32, i32) {
    %c0_i32 = arith.constant 0 : i32
    %c0_i32_0 = arith.constant 0 : i32
    return %arg0, %c0_i32 : i32, i32
  }
  func.func @transform_3(%arg0: i32, %arg1: i32) -> (i32, i32) {
    %c0_i32 = arith.constant 0 : i32
    %c0_i32_0 = arith.constant 0 : i32
    %c0_i32_1 = arith.constant 0 : i32
    return %c0_i32, %c0_i32_0 : i32, i32
  }
  func.func @transform_4(%arg0: i32, %arg1: i32) -> (i32, i32) {
    %c0_i32 = arith.constant 0 : i32
    %c0_i32_0 = arith.constant 0 : i32
    %c0_i32_1 = arith.constant 0 : i32
    return %c0_i32, %c0_i32_0 : i32, i32
  }
  func.func @transform_5(%arg0: i32, %arg1: i32) -> (i32, i32) {
    %c0_i32 = arith.constant 0 : i32
    %c0_i32_0 = arith.constant 0 : i32
    %c0_i32_1 = arith.constant 0 : i32
    return %c0_i32, %c0_i32_0 : i32, i32
  }
  func.func @transform_6(%arg0: i32, %arg1: i32) -> (i32, i32) {
    %c0_i32 = arith.constant 0 : i32
    %c0_i32_0 = arith.constant 0 : i32
    %c0_i32_1 = arith.constant 0 : i32
    return %c0_i32, %c0_i32_0 : i32, i32
  }
  func.func @transform_7(%arg0: i32, %arg1: i32) -> (i32, i32) {
    %c0_i32 = arith.constant 0 : i32
    %c0_i32_0 = arith.constant 0 : i32
    %c0_i32_1 = arith.constant 0 : i32
    return %c0_i32, %c0_i32_0 : i32, i32
  }
  func.func @transform_8(%arg0: i32, %arg1: i32) -> (i32, i32) {
    %c0_i32 = arith.constant 0 : i32
    %c0_i32_0 = arith.constant 0 : i32
    return %arg0, %c0_i32 : i32, i32
  }
  func.func @transform_9(%arg0: i32, %arg1: i32) -> (i32, i32) {
    %c0_i32 = arith.constant 0 : i32
    %c0_i32_0 = arith.constant 0 : i32
    return %arg0, %c0_i32 : i32, i32
  }
}

</mosaic_0001>

<llo_original>
// kernel: tpu_custom_call.1
$region0: #{tpu_custom_call.1}
  #allocation0 [shape = 'u32[]', space=smem, size = 0x4, offset = 0x4, fixed_abs, tag = 'smem constant byte address 0x4 - core index']
  #allocation1 [shape = 'u32[144,128]{1,0:T(1,128)}', space=vmem, size = 0x12000, scoped, tag = 'internal scratch']
  #allocation2 [shape = 'f32[16,128]{1,0:T(8,128)}', space=vmem, size = 0x2000, scoped, tag = 'scratch operand']
  #allocation3 [shape = 'f32[16,128]{1,0:T(8,128)}', space=vmem, size = 0x2000, scoped, tag = 'scratch operand']
  %s0 = inlined_call_operand.hbm [shape: bf16[8,16,128], index: 0, kind: input, shape index: {}]
  %s1 = inlined_call_operand.hbm [shape: f32[16,128], index: 1, kind: input, shape index: {}]
  %s2 = inlined_call_operand.hbm [shape: f32[16,128], index: 2, kind: input, shape index: {}]
  %s3 = inlined_call_operand.hbm [shape: bf16[128,512], index: 3, kind: input, shape index: {}]
  %s4 = inlined_call_operand.hbm [shape: bf16[128,512], index: 4, kind: input, shape index: {}]
  %s5 = inlined_call_operand.hbm [shape: bf16[128,256], index: 5, kind: input, shape index: {}]
  %s6 = inlined_call_operand.hbm [shape: bf16[128,128], index: 6, kind: input, shape index: {}]
  %s7 = inlined_call_operand.vmem [shape: f32[1,512], index: 7, kind: input, shape index: {}]
  %s8 = inlined_call_operand.hbm [shape: f32[16,128], index: 8, kind: output, shape index: {0}]
  %s9 = inlined_call_operand.hbm [shape: f32[16,128], index: 9, kind: output, shape index: {1}]
  %10 = xla_tuple %s8, %s9
  %s11 = sld [smem:[#allocation0]]
  $region109: #{tpu_custom_call.1} parent=0
    _
  %s13 = ssub.s32 1, %s11
  %s14 = scalar_select 0, %s13, %s11
  $region1: #{tpu_custom_call.1} parent=0
    #allocation4 [shape = 'u8[32768]{0}', space=vmem, size = 0x8000, scoped, tag = 'input window, operand 0']
    #allocation5 [shape = 's32[2]{0}', space=sflag, size = 0x8, scoped, tag = 'scoped memory for tpu_custom_call.1']
    #allocation6 [shape = 's32[2]{0}', space=sflag, size = 0x8, scoped, tag = 'scoped memory for tpu_custom_call.1']
    #allocation7 [shape = 'u8[8192]{0}', space=vmem, size = 0x2000, scoped, tag = 'input window, operand 1, single buffered']
    #allocation8 [shape = 's32[1]{0}', space=sflag, size = 0x4, scoped, tag = 'scoped memory for tpu_custom_call.1']
    #allocation9 [shape = 'u8[8192]{0}', space=vmem, size = 0x2000, scoped, tag = 'input window, operand 2, single buffered']
    #allocation10 [shape = 'u8[131072]{0}', space=vmem, size = 0x20000, scoped, tag = 'input window, operand 3, single buffered']
    #allocation11 [shape = 's32[1]{0}', space=sflag, size = 0x4, scoped, tag = 'scoped memory for tpu_custom_call.1']
    #allocation12 [shape = 'u8[131072]{0}', space=vmem, size = 0x20000, scoped, tag = 'input window, operand 4, single buffered']
    #allocation13 [shape = 'u8[65536]{0}', space=vmem, size = 0x10000, scoped, tag = 'input window, operand 5, single buffered']
    #allocation14 [shape = 's32[1]{0}', space=sflag, size = 0x4, scoped, tag = 'scoped memory for tpu_custom_call.1']
    #allocation15 [shape = 'u8[32768]{0}', space=vmem, size = 0x8000, scoped, tag = 'input window, operand 6, single buffered']
    #allocation16 [shape = 'u8[8192]{0}', space=vmem, size = 0x2000, scoped, tag = 'output window, operand 0, single buffered']
    #allocation17 [shape = 'u8[8192]{0}', space=vmem, size = 0x2000, scoped, tag = 'output window, operand 1, single buffered']
    #allocation18 [shape = 's32[1]{0}', space=sflag, size = 0x4, scoped, tag = 'scoped memory for tpu_custom_call.1']
    %15 = vsyncpa [#allocation5], 0
    %s16 = scalar_lea.sflag [#allocation5], 1
    %17 = vsyncpa %s16, 0
    %18 = vsyncpa [#allocation8], 0
    %19 = vsyncpa [#allocation11], 0
    %20 = vsyncpa [#allocation14], 0
    %21 = vsyncpa [#allocation6], 0
    %22 = vsyncpa [#allocation18], 0
    loop: start=0, step=1, limit=4
    $region2: #{tpu_custom_call.1} parent=1 // loop_pre_header
      _
    $region3: #{tpu_custom_call.1} parent=1 // loop_header
      %s24 = sphi 0, %s28
      %p25 = scmp.ge.s32.totalorder %s24, 4
      %s31 = sphi 0, %s43
      %s32 = sphi 0, %s39
      %s33 = sphi 0, %s31
      %s34 = sphi 0, %s32
      %s35 = sphi 0, %s33
      %s36 = sphi 0, %s34
      %s48 = sphi 0, %s50
      %s51 = sphi 0, %s48
      %s52 = sphi 0, %s51
      %s68 = sphi 0, %s52
      %s74 = sphi 0, %s76
      %s77 = sphi 0, %s74
      %s78 = sphi 0, %s77
      %s94 = sphi 0, %s78
      %s100 = sphi 0, %s102
      %s103 = sphi 0, %s100
      %s104 = sphi 0, %s103
      %s120 = sphi 0, %s104
      %s124 = sphi 0, %s124
      %s126 = sphi 0, %s124
      %s127 = sphi 0, %s126
      %s141 = sphi 0, %s127
      %s145 = sphi 0, %s145
      %s147 = sphi 0, %s145
      %s148 = sphi 0, %s147
      %s162 = sphi 0, %s148
      %s166 = sphi 0, %s166
      %s168 = sphi 0, %s166
      %s169 = sphi 0, %s168
      %s183 = sphi 0, %s169
      %s187 = sphi 0, %s187
      %s189 = sphi 0, %s187
      %s190 = sphi 0, %s189
      %s204 = sphi 0, %s190
      %s208 = sphi 0, %s208
      %s210 = sphi 0, %s208
      %s211 = sphi 0, %s210
      %s225 = sphi 0, %s211
      %s231 = sphi 0, %s233
      %s234 = sphi 0, %s231
      %s235 = sphi 0, %s234
      %s251 = sphi 0, %s235
      %s257 = sphi 0, %s259
      %s260 = sphi 0, %s257
      %s261 = sphi 0, %s260
      %s277 = sphi 0, %s261
    $region4: #{tpu_custom_call.1} parent=1 // loop_header_branch
      %27 = sbr.rel (%p25) target = $region8
    $region5: #{tpu_custom_call.1} parent=1 // loop_body
      %s29 = ssub.s32 %s24, 1
      %s30 = ssub.s32 %s24, 2
      %s37 = sadd.s32 1, %s32
      %p38 = scmp.ge.s32.totalorder %s37, 2
      %s39 = scalar_select %p38, 0, %s37
      %s40 = sadd.s32 1, %s31
      %s41 = scalar_select %p38, %s40, %s31
      %p42 = scmp.ge.s32.totalorder %s41, 1
      %s43 = scalar_select %p42, 0, %s41
      %s44 = ssub.s32 %s32, %s39
      %s45 = ssub.s32 %s31, %s43
      %s46 = sor.u32 %s44, %s45
      %p47 = scmp.eq.s32.totalorder %s46, 0
      %s49 = sadd.s32 %s48, 1
      %s50 = scalar_select %p47, %s48, %s49
      %p53 = pneg %p47
      %p54 = scmp.eq.s32.totalorder %s24, 1
      %p55 = por %p53, %p54
      %p56 = scmp.ne.s32.totalorder %s48, %s51
      %p57 = scmp.eq.s32.totalorder %s24, 0
      %p58 = por %p56, %p57
      %p59 = scmp.ne.s32.totalorder %s48, %s51
      %p60 = scmp.eq.s32.totalorder %s29, 1
      %p61 = por %p59, %p60
      %p62 = scmp.ne.s32.totalorder %s51, %s52
      %p63 = scmp.eq.s32.totalorder %s29, 0
      %p64 = por %p62, %p63
      %p65 = scmp.ne.s32.totalorder %s51, %s52
      %p66 = scmp.eq.s32.totalorder %s30, 1
      %p67 = por %p65, %p66
      %p69 = scmp.ne.s32.totalorder %s52, %s68
      %p70 = scmp.eq.s32.totalorder %s30, 0
      %p71 = por %p69, %p70
      %s72 = ssub.s32 %s31, %s43
      %p73 = scmp.eq.s32.totalorder %s72, 0
      %s75 = sadd.s32 %s74, 1
      %s76 = scalar_select %p73, %s74, %s75
      %p79 = pneg %p73
      %p80 = scmp.eq.s32.totalorder %s24, 1
      %p81 = por %p79, %p80
      %p82 = scmp.ne.s32.totalorder %s74, %s77
      %p83 = scmp.eq.s32.totalorder %s24, 0
      %p84 = por %p82, %p83
      %p85 = scmp.ne.s32.totalorder %s74, %s77
      %p86 = scmp.eq.s32.totalorder %s29, 1
      %p87 = por %p85, %p86
      %p88 = scmp.ne.s32.totalorder %s77, %s78
      %p89 = scmp.eq.s32.totalorder %s29, 0
      %p90 = por %p88, %p89
      %p91 = scmp.ne.s32.totalorder %s77, %s78
      %p92 = scmp.eq.s32.totalorder %s30, 1
      %p93 = por %p91, %p92
      %p95 = scmp.ne.s32.totalorder %s78, %s94
      %p96 = scmp.eq.s32.totalorder %s30, 0
      %p97 = por %p95, %p96
      %s98 = ssub.s32 %s31, %s43
      %p99 = scmp.eq.s32.totalorder %s98, 0
      %s101 = sadd.s32 %s100, 1
      %s102 = scalar_select %p99, %s100, %s101
      %p105 = pneg %p99
      %p106 = scmp.eq.s32.totalorder %s24, 1
      %p107 = por %p105, %p106
      %p108 = scmp.ne.s32.totalorder %s100, %s103
      %p109 = scmp.eq.s32.totalorder %s24, 0
      %p110 = por %p108, %p109
      %p111 = scmp.ne.s32.totalorder %s100, %s103
      %p112 = scmp.eq.s32.totalorder %s29, 1
      %p113 = por %p111, %p112
      %p114 = scmp.ne.s32.totalorder %s103, %s104
      %p115 = scmp.eq.s32.totalorder %s29, 0
      %p116 = por %p114, %p115
      %p117 = scmp.ne.s32.totalorder %s103, %s104
      %p118 = scmp.eq.s32.totalorder %s30, 1
      %p119 = por %p117, %p118
      %p121 = scmp.ne.s32.totalorder %s104, %s120
      %p122 = scmp.eq.s32.totalorder %s30, 0
      %p123 = por %p121, %p122
      %s125 = sadd.s32 %s124, 1
      %p128 = scmp.eq.s32.totalorder %s24, 1
      %p129 = scmp.ne.s32.totalorder %s124, %s126
      %p130 = scmp.eq.s32.totalorder %s24, 0
      %p131 = por %p129, %p130
      %p132 = scmp.ne.s32.totalorder %s124, %s126
      %p133 = scmp.eq.s32.totalorder %s29, 1
      %p134 = por %p132, %p133
      %p135 = scmp.ne.s32.totalorder %s126, %s127
      %p136 = scmp.eq.s32.totalorder %s29, 0
      %p137 = por %p135, %p136
      %p138 = scmp.ne.s32.totalorder %s126, %s127
      %p139 = scmp.eq.s32.totalorder %s30, 1
      %p140 = por %p138, %p139
      %p142 = scmp.ne.s32.totalorder %s127, %s141
      %p143 = scmp.eq.s32.totalorder %s30, 0
      %p144 = por %p142, %p143
      %s146 = sadd.s32 %s145, 1
      %p149 = scmp.eq.s32.totalorder %s24, 1
      %p150 = scmp.ne.s32.totalorder %s145, %s147
      %p151 = scmp.eq.s32.totalorder %s24, 0
      %p152 = por %p150, %p151
      %p153 = scmp.ne.s32.totalorder %s145, %s147
      %p154 = scmp.eq.s32.totalorder %s29, 1
      %p155 = por %p153, %p154
      %p156 = scmp.ne.s32.totalorder %s147, %s148
      %p157 = scmp.eq.s32.totalorder %s29, 0
      %p158 = por %p156, %p157
      %p159 = scmp.ne.s32.totalorder %s147, %s148
      %p160 = scmp.eq.s32.totalorder %s30, 1
      %p161 = por %p159, %p160
      %p163 = scmp.ne.s32.totalorder %s148, %s162
      %p164 = scmp.eq.s32.totalorder %s30, 0
      %p165 = por %p163, %p164
      %s167 = sadd.s32 %s166, 1
      %p170 = scmp.eq.s32.totalorder %s24, 1
      %p171 = scmp.ne.s32.totalorder %s166, %s168
      %p172 = scmp.eq.s32.totalorder %s24, 0
      %p173 = por %p171, %p172
      %p174 = scmp.ne.s32.totalorder %s166, %s168
      %p175 = scmp.eq.s32.totalorder %s29, 1
      %p176 = por %p174, %p175
      %p177 = scmp.ne.s32.totalorder %s168, %s169
      %p178 = scmp.eq.s32.totalorder %s29, 0
      %p179 = por %p177, %p178
      %p180 = scmp.ne.s32.totalorder %s168, %s169
      %p181 = scmp.eq.s32.totalorder %s30, 1
      %p182 = por %p180, %p181
      %p184 = scmp.ne.s32.totalorder %s169, %s183
      %p185 = scmp.eq.s32.totalorder %s30, 0
      %p186 = por %p184, %p185
      %s188 = sadd.s32 %s187, 1
      %p191 = scmp.eq.s32.totalorder %s24, 1
      %p192 = scmp.ne.s32.totalorder %s187, %s189
      %p193 = scmp.eq.s32.totalorder %s24, 0
      %p194 = por %p192, %p193
      %p195 = scmp.ne.s32.totalorder %s187, %s189
      %p196 = scmp.eq.s32.totalorder %s29, 1
      %p197 = por %p195, %p196
      %p198 = scmp.ne.s32.totalorder %s189, %s190
      %p199 = scmp.eq.s32.totalorder %s29, 0
      %p200 = por %p198, %p199
      %p201 = scmp.ne.s32.totalorder %s189, %s190
      %p202 = scmp.eq.s32.totalorder %s30, 1
      %p203 = por %p201, %p202
      %p205 = scmp.ne.s32.totalorder %s190, %s204
      %p206 = scmp.eq.s32.totalorder %s30, 0
      %p207 = por %p205, %p206
      %s209 = sadd.s32 %s208, 1
      %p212 = scmp.eq.s32.totalorder %s24, 1
      %p213 = scmp.ne.s32.totalorder %s208, %s210
      %p214 = scmp.eq.s32.totalorder %s24, 0
      %p215 = por %p213, %p214
      %p216 = scmp.ne.s32.totalorder %s208, %s210
      %p217 = scmp.eq.s32.totalorder %s29, 1
      %p218 = por %p216, %p217
      %p219 = scmp.ne.s32.totalorder %s210, %s211
      %p220 = scmp.eq.s32.totalorder %s29, 0
      %p221 = por %p219, %p220
      %p222 = scmp.ne.s32.totalorder %s210, %s211
      %p223 = scmp.eq.s32.totalorder %s30, 1
      %p224 = por %p222, %p223
      %p226 = scmp.ne.s32.totalorder %s211, %s225
      %p227 = scmp.eq.s32.totalorder %s30, 0
      %p228 = por %p226, %p227
      %s229 = ssub.s32 %s31, %s43
      %p230 = scmp.eq.s32.totalorder %s229, 0
      %s232 = sadd.s32 %s231, 1
      %s233 = scalar_select %p230, %s231, %s232
      %p236 = pneg %p230
      %p237 = scmp.eq.s32.totalorder %s24, 1
      %p238 = por %p236, %p237
      %p239 = scmp.ne.s32.totalorder %s231, %s234
      %p240 = scmp.eq.s32.totalorder %s24, 0
      %p241 = por %p239, %p240
      %p242 = scmp.ne.s32.totalorder %s231, %s234
      %p243 = scmp.eq.s32.totalorder %s29, 1
      %p244 = por %p242, %p243
      %p245 = scmp.ne.s32.totalorder %s234, %s235
      %p246 = scmp.eq.s32.totalorder %s29, 0
      %p247 = por %p245, %p246
      %p248 = scmp.ne.s32.totalorder %s234, %s235
      %p249 = scmp.eq.s32.totalorder %s30, 1
      %p250 = por %p248, %p249
      %p252 = scmp.ne.s32.totalorder %s235, %s251
      %p253 = scmp.eq.s32.totalorder %s30, 0
      %p254 = por %p252, %p253
      %s255 = ssub.s32 %s31, %s43
      %p256 = scmp.eq.s32.totalorder %s255, 0
      %s258 = sadd.s32 %s257, 1
      %s259 = scalar_select %p256, %s257, %s258
      %p262 = pneg %p256
      %p263 = scmp.eq.s32.totalorder %s24, 1
      %p264 = por %p262, %p263
      %p265 = scmp.ne.s32.totalorder %s257, %s260
      %p266 = scmp.eq.s32.totalorder %s24, 0
      %p267 = por %p265, %p266
      %p268 = scmp.ne.s32.totalorder %s257, %s260
      %p269 = scmp.eq.s32.totalorder %s29, 1
      %p270 = por %p268, %p269
      %p271 = scmp.ne.s32.totalorder %s260, %s261
      %p272 = scmp.eq.s32.totalorder %s29, 0
      %p273 = por %p271, %p272
      %p274 = scmp.ne.s32.totalorder %s260, %s261
      %p275 = scmp.eq.s32.totalorder %s30, 1
      %p276 = por %p274, %p275
      %p278 = scmp.ne.s32.totalorder %s261, %s277
      %p279 = scmp.eq.s32.totalorder %s30, 0
      %p280 = por %p278, %p279
      %p281 = scmp.le.s32.totalorder 1, %s24
      %p282 = scmp.lt.s32.totalorder %s24, 3
      %p283 = pnand %p281, %p282
      %p284 = pneg %p283
      // Predicated region
      $region9: #{tpu_custom_call.1} parent=5 // pred_check
        _
      $region10: #{tpu_custom_call.1} parent=5 // pred_check_branch
        %286 = sbr.rel (%p283) target = $region12
      $region11: #{tpu_custom_call.1} parent=5 // pred_region
        %s287 = ssub.s32 %s24, 1
        // Predicated region
        $region13: #{tpu_custom_call.1} parent=11 // pred_check
          %p288 = pneg %p90
        $region14: #{tpu_custom_call.1} parent=11 // pred_check_branch
          %290 = sbr.rel (%p288) target = $region16
        $region15: #{tpu_custom_call.1} parent=11 // pred_region
          %s291 = smul.u32 2, %s33
          %s293 = ssub.s32 256, 256
          %294 = vsyncadd [#allocation8], %s293
          %s295 = smul.addr %s291, 128
          %s296 = scalar_lea.hbm %s1, %s295
          %s297 = sshll.u32 [#allocation7], 4
          %s298 = int_to_ptr.vmem [resolvable:$true] %s297
          %303 = dma.hbm_to_vmem [thread:$0]  %s296, 256, %s298, [#allocation8], 128, 128, 8
        $region16: #{tpu_custom_call.1} parent=11 // pred_fallthru
          _
        // Predicated region
        $region17: #{tpu_custom_call.1} parent=11 // pred_check
          %p304 = pneg %p116
        $region18: #{tpu_custom_call.1} parent=11 // pred_check_branch
          %306 = sbr.rel (%p304) target = $region20
        $region19: #{tpu_custom_call.1} parent=11 // pred_region
          %s307 = smul.u32 2, %s33
          %s309 = ssub.s32 256, 256
          %310 = vsyncadd [#allocation8], %s309
          %s311 = smul.addr %s307, 128
          %s312 = scalar_lea.hbm %s2, %s311
          %s313 = sshll.u32 [#allocation9], 4
          %s314 = int_to_ptr.vmem [resolvable:$true] %s313
          %319 = dma.hbm_to_vmem [thread:$0]  %s312, 256, %s314, [#allocation8], 128, 128, 8
        $region20: #{tpu_custom_call.1} parent=11 // pred_fallthru
          _
        // Predicated region
        $region21: #{tpu_custom_call.1} parent=11 // pred_check
          %p320 = pneg %p137
        $region22: #{tpu_custom_call.1} parent=11 // pred_check_branch
          %322 = sbr.rel (%p320) target = $region24
        $region23: #{tpu_custom_call.1} parent=11 // pred_region
          %s324 = ssub.s32 4096, 4096
          %325 = vsyncadd [#allocation11], %s324
          %s326 = sshll.u32 [#allocation10], 4
          %s327 = int_to_ptr.vmem [resolvable:$true] %s326
          %332 = dma.hbm_to_vmem [thread:$0]  %s3, 4096, %s327, [#allocation11], 256, 256, 16
        $region24: #{tpu_custom_call.1} parent=11 // pred_fallthru
          _
        // Predicated region
        $region25: #{tpu_custom_call.1} parent=11 // pred_check
          %p333 = pneg %p158
        $region26: #{tpu_custom_call.1} parent=11 // pred_check_branch
          %335 = sbr.rel (%p333) target = $region28
        $region27: #{tpu_custom_call.1} parent=11 // pred_region
          %s337 = ssub.s32 4096, 4096
          %338 = vsyncadd [#allocation11], %s337
          %s339 = sshll.u32 [#allocation12], 4
          %s340 = int_to_ptr.vmem [resolvable:$true] %s339
          %345 = dma.hbm_to_vmem [thread:$0]  %s4, 4096, %s340, [#allocation11], 256, 256, 16
        $region28: #{tpu_custom_call.1} parent=11 // pred_fallthru
          _
        // Predicated region
        $region29: #{tpu_custom_call.1} parent=11 // pred_check
          %p346 = pneg %p179
        $region30: #{tpu_custom_call.1} parent=11 // pred_check_branch
          %348 = sbr.rel (%p346) target = $region32
        $region31: #{tpu_custom_call.1} parent=11 // pred_region
          %s350 = ssub.s32 2048, 2048
          %351 = vsyncadd [#allocation14], %s350
          %s352 = sshll.u32 [#allocation13], 4
          %s353 = int_to_ptr.vmem [resolvable:$true] %s352
          %358 = dma.hbm_to_vmem [thread:$0]  %s5, 2048, %s353, [#allocation14], 128, 128, 8
        $region32: #{tpu_custom_call.1} parent=11 // pred_fallthru
          _
        // Predicated region
        $region33: #{tpu_custom_call.1} parent=11 // pred_check
          %p359 = pneg %p200
        $region34: #{tpu_custom_call.1} parent=11 // pred_check_branch
          %361 = sbr.rel (%p359) target = $region36
        $region35: #{tpu_custom_call.1} parent=11 // pred_region
          %s363 = ssub.s32 1024, 1024
          %364 = vsyncadd [#allocation14], %s363
          %s365 = sshll.u32 [#allocation15], 4
          %s366 = int_to_ptr.vmem [resolvable:$true] %s365
          %371 = dma.hbm_to_vmem [thread:$0]  %s6, 1024, %s366, [#allocation14], 64, 64, 4
        $region36: #{tpu_custom_call.1} parent=11 // pred_fallthru
          _
        // Predicated region
        $region37: #{tpu_custom_call.1} parent=11 // pred_check
          %p372 = pneg %p221
        $region38: #{tpu_custom_call.1} parent=11 // pred_check_branch
          %374 = sbr.rel (%p372) target = $region40
        $region39: #{tpu_custom_call.1} parent=11 // pred_region
          _
        $region40: #{tpu_custom_call.1} parent=11 // pred_fallthru
          _
      $region12: #{tpu_custom_call.1} parent=5 // pred_fallthru
        _
      %p375 = scmp.lt.s32.totalorder %s24, 2
      // Predicated region
      $region41: #{tpu_custom_call.1} parent=5 // pred_check
        %p376 = pneg %p375
      $region42: #{tpu_custom_call.1} parent=5 // pred_check_branch
        %378 = sbr.rel (%p376) target = $region44
      $region43: #{tpu_custom_call.1} parent=5 // pred_region
        // Predicated region
        $region45: #{tpu_custom_call.1} parent=43 // pred_check
          %p379 = pneg %p58
        $region46: #{tpu_custom_call.1} parent=43 // pred_check_branch
          %381 = sbr.rel (%p379) target = $region48
        $region47: #{tpu_custom_call.1} parent=43 // pred_region
          %s382 = sand.u32 %s48, 1
          %s383 = scalar_lea.sflag [#allocation5], %s382
          %s384 = sand.u32 %s48, 1
          %s385 = smul.addr %s384, 32
          %s386 = scalar_lea.vmem [#allocation4], %s385
          %s387 = smul.u32 4, %s32
          %s388 = smul.u32 2, %s31
          %s390 = ssub.s32 512, 512
          %391 = vsyncadd %s383, %s390
          %s392 = smul.addr %s387, 2
          %s393 = sadd.s32 %s388, %s392
          %s394 = smul.addr %s393, 64
          %s395 = scalar_lea.hbm %s0, %s394
          %s396 = sshll.u32 %s386, 4
          %s397 = int_to_ptr.vmem [resolvable:$true] %s396
          %402 = dma.hbm_to_vmem [thread:$0]  %s395, 512, %s397, %s383, 64, 64, 4
        $region48: #{tpu_custom_call.1} parent=43 // pred_fallthru
          _
      $region44: #{tpu_custom_call.1} parent=5 // pred_fallthru
        _
      %p403 = scmp.le.s32.totalorder 1, %s24
      %p404 = scmp.lt.s32.totalorder %s24, 3
      %p405 = pnand %p403, %p404
      %p406 = pneg %p405
      // Predicated region
      $region49: #{tpu_custom_call.1} parent=5 // pred_check
        _
      $region50: #{tpu_custom_call.1} parent=5 // pred_check_branch
        %408 = sbr.rel (%p405) target = $region52
      $region51: #{tpu_custom_call.1} parent=5 // pred_region
        %s409 = ssub.s32 %s24, 1
        %s410 = sand.u32 %s51, 1
        %s411 = scalar_lea.sflag [#allocation5], %s410
        %s412 = sand.u32 %s51, 1
        %s413 = smul.addr %s412, 32
        %s414 = scalar_lea.vmem [#allocation4], %s413
        // Predicated region
        $region53: #{tpu_custom_call.1} parent=51 // pred_check
          %p415 = pneg %p64
        $region54: #{tpu_custom_call.1} parent=51 // pred_check_branch
          %417 = sbr.rel (%p415) target = $region56
        $region55: #{tpu_custom_call.1} parent=51 // pred_region
          %418 = dma.done %s411, 512
        $region56: #{tpu_custom_call.1} parent=51 // pred_fallthru
          _
        // Predicated region
        $region57: #{tpu_custom_call.1} parent=51 // pred_check
          %p419 = pneg %p90
        $region58: #{tpu_custom_call.1} parent=51 // pred_check_branch
          %421 = sbr.rel (%p419) target = $region60
        $region59: #{tpu_custom_call.1} parent=51 // pred_region
          %422 = dma.done [#allocation8], 256
        $region60: #{tpu_custom_call.1} parent=51 // pred_fallthru
          _
        // Predicated region
        $region61: #{tpu_custom_call.1} parent=51 // pred_check
          %p423 = pneg %p116
        $region62: #{tpu_custom_call.1} parent=51 // pred_check_branch
          %425 = sbr.rel (%p423) target = $region64
        $region63: #{tpu_custom_call.1} parent=51 // pred_region
          %426 = dma.done [#allocation8], 256
        $region64: #{tpu_custom_call.1} parent=51 // pred_fallthru
          _
        // Predicated region
        $region65: #{tpu_custom_call.1} parent=51 // pred_check
          %p427 = pneg %p137
        $region66: #{tpu_custom_call.1} parent=51 // pred_check_branch
          %429 = sbr.rel (%p427) target = $region68
        $region67: #{tpu_custom_call.1} parent=51 // pred_region
          %430 = dma.done [#allocation11], 4096
        $region68: #{tpu_custom_call.1} parent=51 // pred_fallthru
          _
        // Predicated region
        $region69: #{tpu_custom_call.1} parent=51 // pred_check
          %p431 = pneg %p158
        $region70: #{tpu_custom_call.1} parent=51 // pred_check_branch
          %433 = sbr.rel (%p431) target = $region72
        $region71: #{tpu_custom_call.1} parent=51 // pred_region
          %434 = dma.done [#allocation11], 4096
        $region72: #{tpu_custom_call.1} parent=51 // pred_fallthru
          _
        // Predicated region
        $region73: #{tpu_custom_call.1} parent=51 // pred_check
          %p435 = pneg %p179
        $region74: #{tpu_custom_call.1} parent=51 // pred_check_branch
          %437 = sbr.rel (%p435) target = $region76
        $region75: #{tpu_custom_call.1} parent=51 // pred_region
          %438 = dma.done [#allocation14], 2048
        $region76: #{tpu_custom_call.1} parent=51 // pred_fallthru
          _
        // Predicated region
        $region77: #{tpu_custom_call.1} parent=51 // pred_check
          %p439 = pneg %p200
        $region78: #{tpu_custom_call.1} parent=51 // pred_check_branch
          %441 = sbr.rel (%p439) target = $region80
        $region79: #{tpu_custom_call.1} parent=51 // pred_region
          %442 = dma.done [#allocation14], 1024
        $region80: #{tpu_custom_call.1} parent=51 // pred_fallthru
          _
        %s443 = sand.u32 %s51, 1
        %s444 = scalar_lea.sflag [#allocation5], %s443
        %s445 = sand.u32 %s51, 1
        %s446 = smul.addr %s445, 32
        %s447 = scalar_lea.vmem [#allocation4], %s446
        %p448 = pneg %p64
        %p449 = pneg %p61
        %p450 = pneg %p90
        %p451 = pneg %p87
        %p452 = pneg %p116
        %p453 = pneg %p113
        %p454 = pneg %p137
        %p455 = pneg %p134
        %p456 = pneg %p158
        %p457 = pneg %p155
        %p458 = pneg %p179
        %p459 = pneg %p176
        %p460 = pneg %p200
        %p461 = pneg %p197
        %p462 = pneg %p221
        %p463 = pneg %p218
        %p464 = pneg %p247
        %p465 = pneg %p244
        %p466 = pneg %p273
        %p467 = pneg %p270
        %s468 = smul.u32 4, %s34
        %s469 = smul.u32 2, %s33
        %s470 = smul.u32 2, %s33
        %s471 = smul.u32 2, %s33
        %s472 = smul.u32 2, %s33
        %s473 = smul.u32 2, %s33
        %p475 = scmp.eq.s32.totalorder %s34, 0
        // Predicated region
        $region81: #{tpu_custom_call.1} parent=51 // pred_check
          %p476 = pneg %p475
        $region82: #{tpu_custom_call.1} parent=51 // pred_check_branch
          %478 = sbr.rel (%p476) target = $region84
        $region83: #{tpu_custom_call.1} parent=51 // pred_region
          %v479 = vld [vmem:[#allocation7] sm:$0xff]
          %v480 = vld [vmem:[#allocation7 + $0x8] sm:$0xff]
          %481 = vst [vmem:[#allocation2] sm:$0xff] %v479
          %482 = vst [vmem:[#allocation2 + $0x8] sm:$0xff] %v480
          %v483 = vld [vmem:[#allocation9] sm:$0xff]
          %v484 = vld [vmem:[#allocation9 + $0x8] sm:$0xff]
          %485 = vst [vmem:[#allocation3] sm:$0xff] %v483
          %486 = vst [vmem:[#allocation3 + $0x8] sm:$0xff] %v484
        $region84: #{tpu_custom_call.1} parent=51 // pred_fallthru
          _
        %v487 = vld [vmem:[#allocation10] sm:$0xff]
        %v488 = vld [vmem:[#allocation10 + $0x8] sm:$0xff]
        %v489 = vld [vmem:[#allocation10 + $0x10] sm:$0xff]
        %v490 = vld [vmem:[#allocation10 + $0x18] sm:$0xff]
        %v491 = vld [vmem:[#allocation10 + $0x20] sm:$0xff]
        %v492 = vld [vmem:[#allocation10 + $0x28] sm:$0xff]
        %v493 = vld [vmem:[#allocation10 + $0x30] sm:$0xff]
        %v494 = vld [vmem:[#allocation10 + $0x38] sm:$0xff]
        %v495 = vld [vmem:[#allocation10 + $0x40] sm:$0xff]
        %v496 = vld [vmem:[#allocation10 + $0x48] sm:$0xff]
        %v497 = vld [vmem:[#allocation10 + $0x50] sm:$0xff]
        %v498 = vld [vmem:[#allocation10 + $0x58] sm:$0xff]
        %v499 = vld [vmem:[#allocation10 + $0x60] sm:$0xff]
        %v500 = vld [vmem:[#allocation10 + $0x68] sm:$0xff]
        %v501 = vld [vmem:[#allocation10 + $0x70] sm:$0xff]
        %v502 = vld [vmem:[#allocation10 + $0x78] sm:$0xff]
        %v503 = vld [vmem:[#allocation10 + $0x80] sm:$0xff]
        %v504 = vld [vmem:[#allocation10 + $0x88] sm:$0xff]
        %v505 = vld [vmem:[#allocation10 + $0x90] sm:$0xff]
        %v506 = vld [vmem:[#allocation10 + $0x98] sm:$0xff]
        %v507 = vld [vmem:[#allocation10 + $0xa0] sm:$0xff]
        %v508 = vld [vmem:[#allocation10 + $0xa8] sm:$0xff]
        %v509 = vld [vmem:[#allocation10 + $0xb0] sm:$0xff]
        %v510 = vld [vmem:[#allocation10 + $0xb8] sm:$0xff]
        %v511 = vld [vmem:[#allocation10 + $0xc0] sm:$0xff]
        %v512 = vld [vmem:[#allocation10 + $0xc8] sm:$0xff]
        %v513 = vld [vmem:[#allocation10 + $0xd0] sm:$0xff]
        %v514 = vld [vmem:[#allocation10 + $0xd8] sm:$0xff]
        %v515 = vld [vmem:[#allocation10 + $0xe0] sm:$0xff]
        %v516 = vld [vmem:[#allocation10 + $0xe8] sm:$0xff]
        %v517 = vld [vmem:[#allocation10 + $0xf0] sm:$0xff]
        %v518 = vld [vmem:[#allocation10 + $0xf8] sm:$0xff]
        %v519 = vld [vmem:[#allocation12] sm:$0xff]
        %v520 = vld [vmem:[#allocation12 + $0x8] sm:$0xff]
        %v521 = vld [vmem:[#allocation12 + $0x10] sm:$0xff]
        %v522 = vld [vmem:[#allocation12 + $0x18] sm:$0xff]
        %v523 = vld [vmem:[#allocation12 + $0x20] sm:$0xff]
        %v524 = vld [vmem:[#allocation12 + $0x28] sm:$0xff]
        %v525 = vld [vmem:[#allocation12 + $0x30] sm:$0xff]
        %v526 = vld [vmem:[#allocation12 + $0x38] sm:$0xff]
        %v527 = vld [vmem:[#allocation12 + $0x40] sm:$0xff]
        %v528 = vld [vmem:[#allocation12 + $0x48] sm:$0xff]
        %v529 = vld [vmem:[#allocation12 + $0x50] sm:$0xff]
        %v530 = vld [vmem:[#allocation12 + $0x58] sm:$0xff]
        %v531 = vld [vmem:[#allocation12 + $0x60] sm:$0xff]
        %v532 = vld [vmem:[#allocation12 + $0x68] sm:$0xff]
        %v533 = vld [vmem:[#allocation12 + $0x70] sm:$0xff]
        %v534 = vld [vmem:[#allocation12 + $0x78] sm:$0xff]
        %v535 = vld [vmem:[#allocation12 + $0x80] sm:$0xff]
        %v536 = vld [vmem:[#allocation12 + $0x88] sm:$0xff]
        %v537 = vld [vmem:[#allocation12 + $0x90] sm:$0xff]
        %v538 = vld [vmem:[#allocation12 + $0x98] sm:$0xff]
        %v539 = vld [vmem:[#allocation12 + $0xa0] sm:$0xff]
        %v540 = vld [vmem:[#allocation12 + $0xa8] sm:$0xff]
        %v541 = vld [vmem:[#allocation12 + $0xb0] sm:$0xff]
        %v542 = vld [vmem:[#allocation12 + $0xb8] sm:$0xff]
        %v543 = vld [vmem:[#allocation12 + $0xc0] sm:$0xff]
        %v544 = vld [vmem:[#allocation12 + $0xc8] sm:$0xff]
        %v545 = vld [vmem:[#allocation12 + $0xd0] sm:$0xff]
        %v546 = vld [vmem:[#allocation12 + $0xd8] sm:$0xff]
        %v547 = vld [vmem:[#allocation12 + $0xe0] sm:$0xff]
        %v548 = vld [vmem:[#allocation12 + $0xe8] sm:$0xff]
        %v549 = vld [vmem:[#allocation12 + $0xf0] sm:$0xff]
        %v550 = vld [vmem:[#allocation12 + $0xf8] sm:$0xff]
        %v551 = vld [vmem:[#allocation13] sm:$0xff]
        %v552 = vld [vmem:[#allocation13 + $0x8] sm:$0xff]
        %v553 = vld [vmem:[#allocation13 + $0x10] sm:$0xff]
        %v554 = vld [vmem:[#allocation13 + $0x18] sm:$0xff]
        %v555 = vld [vmem:[#allocation13 + $0x20] sm:$0xff]
        %v556 = vld [vmem:[#allocation13 + $0x28] sm:$0xff]
        %v557 = vld [vmem:[#allocation13 + $0x30] sm:$0xff]
        %v558 = vld [vmem:[#allocation13 + $0x38] sm:$0xff]
        %v559 = vld [vmem:[#allocation13 + $0x40] sm:$0xff]
        %v560 = vld [vmem:[#allocation13 + $0x48] sm:$0xff]
        %v561 = vld [vmem:[#allocation13 + $0x50] sm:$0xff]
        %v562 = vld [vmem:[#allocation13 + $0x58] sm:$0xff]
        %v563 = vld [vmem:[#allocation13 + $0x60] sm:$0xff]
        %v564 = vld [vmem:[#allocation13 + $0x68] sm:$0xff]
        %v565 = vld [vmem:[#allocation13 + $0x70] sm:$0xff]
        %v566 = vld [vmem:[#allocation13 + $0x78] sm:$0xff]
        %v567 = vld [vmem:[#allocation15] sm:$0xf]
        %v568 = vld [vmem:[#allocation15 + $0x4] sm:$0xf]
        %v569 = vld [vmem:[#allocation15 + $0x8] sm:$0xf]
        %v570 = vld [vmem:[#allocation15 + $0xc] sm:$0xf]
        %v571 = vld [vmem:[#allocation15 + $0x10] sm:$0xf]
        %v572 = vld [vmem:[#allocation15 + $0x14] sm:$0xf]
        %v573 = vld [vmem:[#allocation15 + $0x18] sm:$0xf]
        %v574 = vld [vmem:[#allocation15 + $0x1c] sm:$0xf]
        %v575 = vld [vmem:[#allocation15 + $0x20] sm:$0xf]
        %v576 = vld [vmem:[#allocation15 + $0x24] sm:$0xf]
        %v577 = vld [vmem:[#allocation15 + $0x28] sm:$0xf]
        %v578 = vld [vmem:[#allocation15 + $0x2c] sm:$0xf]
        %v579 = vld [vmem:[#allocation15 + $0x30] sm:$0xf]
        %v580 = vld [vmem:[#allocation15 + $0x34] sm:$0xf]
        %v581 = vld [vmem:[#allocation15 + $0x38] sm:$0xf]
        %v582 = vld [vmem:[#allocation15 + $0x3c] sm:$0xf]
        %v583 = vld [vmem:[%s7] sm:$0xf]
        %v584 = vld [vmem:[#allocation2] sm:$0xff]
        %v585 = vld [vmem:[#allocation2 + $0x8] sm:$0xff]
        %v586 = vld [vmem:[#allocation3] sm:$0xff]
        %v587 = vld [vmem:[#allocation3 + $0x8] sm:$0xff]
        %v588 = vld [vmem:[%s414] sm:$0xf]
        %v589 = vld [vmem:[%s414 + $0x4] sm:$0xf]
        %v590 = vpack.c.bf16 %v585, %v584
        %v623 = vunpack.c.l.b16 %v519
        %v624 = vunpack.c.h.b16 %v519
        %v625 = vunpack.c.l.b16 %v520
        %v626 = vunpack.c.h.b16 %v520
        %v627 = vunpack.c.l.b16 %v521
        %v628 = vunpack.c.h.b16 %v521
        %v629 = vunpack.c.l.b16 %v522
        %v630 = vunpack.c.h.b16 %v522
        %v631 = vunpack.c.l.b16 %v523
        %v632 = vunpack.c.h.b16 %v523
        %v633 = vunpack.c.l.b16 %v524
        %v634 = vunpack.c.h.b16 %v524
        %v635 = vunpack.c.l.b16 %v525
        %v636 = vunpack.c.h.b16 %v525
        %v637 = vunpack.c.l.b16 %v526
        %v638 = vunpack.c.h.b16 %v526
        %v639 = vunpack.c.l.b16 %v527
        %v640 = vunpack.c.h.b16 %v527
        %v641 = vunpack.c.l.b16 %v528
        %v642 = vunpack.c.h.b16 %v528
        %v643 = vunpack.c.l.b16 %v529
        %v644 = vunpack.c.h.b16 %v529
        %v645 = vunpack.c.l.b16 %v530
        %v646 = vunpack.c.h.b16 %v530
        %v647 = vunpack.c.l.b16 %v531
        %v648 = vunpack.c.h.b16 %v531
        %v649 = vunpack.c.l.b16 %v532
        %v650 = vunpack.c.h.b16 %v532
        %v651 = vunpack.c.l.b16 %v533
        %v652 = vunpack.c.h.b16 %v533
        %v653 = vunpack.c.l.b16 %v534
        %v654 = vunpack.c.h.b16 %v534
        %v655 = vunpack.c.l.b16 %v535
        %v656 = vunpack.c.h.b16 %v535
        %v657 = vunpack.c.l.b16 %v536
        %v658 = vunpack.c.h.b16 %v536
        %v659 = vunpack.c.l.b16 %v537
        %v660 = vunpack.c.h.b16 %v537
        %v661 = vunpack.c.l.b16 %v538
        %v662 = vunpack.c.h.b16 %v538
        %v663 = vunpack.c.l.b16 %v539
        %v664 = vunpack.c.h.b16 %v539
        %v665 = vunpack.c.l.b16 %v540
        %v666 = vunpack.c.h.b16 %v540
        %v667 = vunpack.c.l.b16 %v541
        %v668 = vunpack.c.h.b16 %v541
        %v669 = vunpack.c.l.b16 %v542
        %v670 = vunpack.c.h.b16 %v542
        %v671 = vunpack.c.l.b16 %v543
        %v672 = vunpack.c.h.b16 %v543
        %v673 = vunpack.c.l.b16 %v544
        %v674 = vunpack.c.h.b16 %v544
        %v675 = vunpack.c.l.b16 %v545
        %v676 = vunpack.c.h.b16 %v545
        %v677 = vunpack.c.l.b16 %v546
        %v678 = vunpack.c.h.b16 %v546
        %v679 = vunpack.c.l.b16 %v547
        %v680 = vunpack.c.h.b16 %v547
        %v681 = vunpack.c.l.b16 %v548
        %v682 = vunpack.c.h.b16 %v548
        %v683 = vunpack.c.l.b16 %v549
        %v684 = vunpack.c.h.b16 %v549
        %v685 = vunpack.c.l.b16 %v550
        %v686 = vunpack.c.h.b16 %v550
        %v687 = vpack.c.b16 %v627, %v623
        %v688 = vpack.c.b16 %v628, %v624
        %v689 = vpack.c.b16 %v629, %v625
        %v690 = vpack.c.b16 %v630, %v626
        %v691 = vpack.c.b16 %v635, %v631
        %v692 = vpack.c.b16 %v636, %v632
        %v693 = vpack.c.b16 %v637, %v633
        %v694 = vpack.c.b16 %v638, %v634
        %v695 = vpack.c.b16 %v643, %v639
        %v696 = vpack.c.b16 %v644, %v640
        %v697 = vpack.c.b16 %v645, %v641
        %v698 = vpack.c.b16 %v646, %v642
        %v699 = vpack.c.b16 %v651, %v647
        %v700 = vpack.c.b16 %v652, %v648
        %v701 = vpack.c.b16 %v653, %v649
        %v702 = vpack.c.b16 %v654, %v650
        %v703 = vpack.c.b16 %v659, %v655
        %v704 = vpack.c.b16 %v660, %v656
        %v705 = vpack.c.b16 %v661, %v657
        %v706 = vpack.c.b16 %v662, %v658
        %v707 = vpack.c.b16 %v667, %v663
        %v708 = vpack.c.b16 %v668, %v664
        %v709 = vpack.c.b16 %v669, %v665
        %v710 = vpack.c.b16 %v670, %v666
        %v711 = vpack.c.b16 %v675, %v671
        %v712 = vpack.c.b16 %v676, %v672
        %v713 = vpack.c.b16 %v677, %v673
        %v714 = vpack.c.b16 %v678, %v674
        %v715 = vpack.c.b16 %v683, %v679
        %v716 = vpack.c.b16 %v684, %v680
        %v717 = vpack.c.b16 %v685, %v681
        %v718 = vpack.c.b16 %v686, %v682
        %751 = vmatprep.subr.bf16.mxu0 %v688
        %752 = vmatpush1.bf16.msra.mxu0 %v687
        %753 = vmatprep.subr.bf16.mxu0 %v692
        %754 = vmatpush1.bf16.msra.mxu0 %v691
        %755 = vmatprep.subr.bf16.mxu0 %v696
        %756 = vmatpush1.bf16.msra.mxu0 %v695
        %757 = vmatprep.subr.bf16.mxu0 %v700
        %758 = vmatpush1.bf16.msra.mxu0 %v699
        %759 = vmatprep.subr.bf16.mxu0 %v704
        %760 = vmatpush1.bf16.msra.mxu0 %v703
        %761 = vmatprep.subr.bf16.mxu0 %v708
        %762 = vmatpush1.bf16.msra.mxu0 %v707
        %763 = vmatprep.subr.bf16.mxu0 %v712
        %764 = vmatpush1.bf16.msra.mxu0 %v711
        %765 = vmatprep.subr.bf16.mxu0 %v716
        %766 = vmatpush1.bf16.msra.mxu0 %v715
        %767 = vmatprep.subr.bf16.mxu0 0
        %768 = vmatpush1.bf16.msra.mxu0 0
        %769 = vmatprep.subr.bf16.mxu0 0
        %770 = vmatpush1.bf16.msra.mxu0 0
        %771 = vmatprep.subr.bf16.mxu0 0
        %772 = vmatpush1.bf16.msra.mxu0 0
        %773 = vmatprep.subr.bf16.mxu0 0
        %774 = vmatpush1.bf16.msra.mxu0 0
        %775 = vmatprep.subr.bf16.mxu0 0
        %776 = vmatpush1.bf16.msra.mxu0 0
        %777 = vmatprep.subr.bf16.mxu0 0
        %778 = vmatpush1.bf16.msra.mxu0 0
        %779 = vmatprep.subr.bf16.mxu0 0
        %780 = vmatpush1.bf16.msra.mxu0 0
        %781 = vmatprep.subr.bf16.mxu0 0
        %782 = vmatpush1.bf16.msra.mxu0 0
        %783 = vmatprep.mubr.bf16.mxu0 0
        %784 = vmatmul.mubr.bf16.gmra.mrb[0].mxu0 %v590
        %v785 = vpop.f32.mrb[0].mxu0
        %v786 = vadd.f32 0.0, %v785
        %v787 = vpop.f32.mrb[0].mxu0
        %v788 = vadd.f32 0.0, %v787
        %v789 = vpop.f32.mrb[0].mxu0
        %v790 = vadd.f32 0.0, %v789
        %v791 = vpop.f32.mrb[0].mxu0
        %v792 = vadd.f32 0.0, %v791
        %793 = vdwg.mxu0
        %794 = vmatprep.subr.bf16.mxu0 %v690
        %795 = vmatpush1.bf16.msra.mxu0 %v689
        %796 = vmatprep.subr.bf16.mxu0 %v694
        %797 = vmatpush1.bf16.msra.mxu0 %v693
        %798 = vmatprep.subr.bf16.mxu0 %v698
        %799 = vmatpush1.bf16.msra.mxu0 %v697
        %800 = vmatprep.subr.bf16.mxu0 %v702
        %801 = vmatpush1.bf16.msra.mxu0 %v701
        %802 = vmatprep.subr.bf16.mxu0 %v706
        %803 = vmatpush1.bf16.msra.mxu0 %v705
        %804 = vmatprep.subr.bf16.mxu0 %v710
        %805 = vmatpush1.bf16.msra.mxu0 %v709
        %806 = vmatprep.subr.bf16.mxu0 %v714
        %807 = vmatpush1.bf16.msra.mxu0 %v713
        %808 = vmatprep.subr.bf16.mxu0 %v718
        %809 = vmatpush1.bf16.msra.mxu0 %v717
        %810 = vmatprep.subr.bf16.mxu0 0
        %811 = vmatpush1.bf16.msra.mxu0 0
        %812 = vmatprep.subr.bf16.mxu0 0
        %813 = vmatpush1.bf16.msra.mxu0 0
        %814 = vmatprep.subr.bf16.mxu0 0
        %815 = vmatpush1.bf16.msra.mxu0 0
        %816 = vmatprep.subr.bf16.mxu0 0
        %817 = vmatpush1.bf16.msra.mxu0 0
        %818 = vmatprep.subr.bf16.mxu0 0
        %819 = vmatpush1.bf16.msra.mxu0 0
        %820 = vmatprep.subr.bf16.mxu0 0
        %821 = vmatpush1.bf16.msra.mxu0 0
        %822 = vmatprep.subr.bf16.mxu0 0
        %823 = vmatpush1.bf16.msra.mxu0 0
        %824 = vmatprep.subr.bf16.mxu0 0
        %825 = vmatpush1.bf16.msra.mxu0 0
        %826 = vmatprep.mubr.bf16.mxu0 0
        %827 = vmatmul.mubr.bf16.gmra.mrb[0].mxu0 %v590
        %v828 = vpop.f32.mrb[0].mxu0
        %v829 = vadd.f32 0.0, %v828
        %v830 = vpop.f32.mrb[0].mxu0
        %v831 = vadd.f32 0.0, %v830
        %v832 = vpop.f32.mrb[0].mxu0
        %v833 = vadd.f32 0.0, %v832
        %v834 = vpop.f32.mrb[0].mxu0
        %v835 = vadd.f32 0.0, %v834
        %836 = vdwg.mxu0
        %v839 = vunpack.c.l.b16 %v588
        %v840 = vunpack.c.l.b16 %v589
        %v841 = vpack.c.b16 %v840, %v839
        %v875 = vunpack.c.l.b16 %v487
        %v876 = vunpack.c.h.b16 %v487
        %v877 = vunpack.c.l.b16 %v488
        %v878 = vunpack.c.h.b16 %v488
        %v879 = vunpack.c.l.b16 %v489
        %v880 = vunpack.c.h.b16 %v489
        %v881 = vunpack.c.l.b16 %v490
        %v882 = vunpack.c.h.b16 %v490
        %v883 = vunpack.c.l.b16 %v491
        %v884 = vunpack.c.h.b16 %v491
        %v885 = vunpack.c.l.b16 %v492
        %v886 = vunpack.c.h.b16 %v492
        %v887 = vunpack.c.l.b16 %v493
        %v888 = vunpack.c.h.b16 %v493
        %v889 = vunpack.c.l.b16 %v494
        %v890 = vunpack.c.h.b16 %v494
        %v891 = vunpack.c.l.b16 %v495
        %v892 = vunpack.c.h.b16 %v495
        %v893 = vunpack.c.l.b16 %v496
        %v894 = vunpack.c.h.b16 %v496
        %v895 = vunpack.c.l.b16 %v497
        %v896 = vunpack.c.h.b16 %v497
        %v897 = vunpack.c.l.b16 %v498
        %v898 = vunpack.c.h.b16 %v498
        %v899 = vunpack.c.l.b16 %v499
        %v900 = vunpack.c.h.b16 %v499
        %v901 = vunpack.c.l.b16 %v500
        %v902 = vunpack.c.h.b16 %v500
        %v903 = vunpack.c.l.b16 %v501
        %v904 = vunpack.c.h.b16 %v501
        %v905 = vunpack.c.l.b16 %v502
        %v906 = vunpack.c.h.b16 %v502
        %v907 = vunpack.c.l.b16 %v503
        %v908 = vunpack.c.h.b16 %v503
        %v909 = vunpack.c.l.b16 %v504
        %v910 = vunpack.c.h.b16 %v504
        %v911 = vunpack.c.l.b16 %v505
        %v912 = vunpack.c.h.b16 %v505
        %v913 = vunpack.c.l.b16 %v506
        %v914 = vunpack.c.h.b16 %v506
        %v915 = vunpack.c.l.b16 %v507
        %v916 = vunpack.c.h.b16 %v507
        %v917 = vunpack.c.l.b16 %v508
        %v918 = vunpack.c.h.b16 %v508
        %v919 = vunpack.c.l.b16 %v509
        %v920 = vunpack.c.h.b16 %v509
        %v921 = vunpack.c.l.b16 %v510
        %v922 = vunpack.c.h.b16 %v510
        %v923 = vunpack.c.l.b16 %v511
        %v924 = vunpack.c.h.b16 %v511
        %v925 = vunpack.c.l.b16 %v512
        %v926 = vunpack.c.h.b16 %v512
        %v927 = vunpack.c.l.b16 %v513
        %v928 = vunpack.c.h.b16 %v513
        %v929 = vunpack.c.l.b16 %v514
        %v930 = vunpack.c.h.b16 %v514
        %v931 = vunpack.c.l.b16 %v515
        %v932 = vunpack.c.h.b16 %v515
        %v933 = vunpack.c.l.b16 %v516
        %v934 = vunpack.c.h.b16 %v516
        %v935 = vunpack.c.l.b16 %v517
        %v936 = vunpack.c.h.b16 %v517
        %v937 = vunpack.c.l.b16 %v518
        %v938 = vunpack.c.h.b16 %v518
        %v939 = vpack.c.b16 %v879, %v875
        %v940 = vpack.c.b16 %v880, %v876
        %v941 = vpack.c.b16 %v881, %v877
        %v942 = vpack.c.b16 %v882, %v878
        %v943 = vpack.c.b16 %v887, %v883
        %v944 = vpack.c.b16 %v888, %v884
        %v945 = vpack.c.b16 %v889, %v885
        %v946 = vpack.c.b16 %v890, %v886
        %v947 = vpack.c.b16 %v895, %v891
        %v948 = vpack.c.b16 %v896, %v892
        %v949 = vpack.c.b16 %v897, %v893
        %v950 = vpack.c.b16 %v898, %v894
        %v951 = vpack.c.b16 %v903, %v899
        %v952 = vpack.c.b16 %v904, %v900
        %v953 = vpack.c.b16 %v905, %v901
        %v954 = vpack.c.b16 %v906, %v902
        %v955 = vpack.c.b16 %v911, %v907
        %v956 = vpack.c.b16 %v912, %v908
        %v957 = vpack.c.b16 %v913, %v909
        %v958 = vpack.c.b16 %v914, %v910
        %v959 = vpack.c.b16 %v919, %v915
        %v960 = vpack.c.b16 %v920, %v916
        %v961 = vpack.c.b16 %v921, %v917
        %v962 = vpack.c.b16 %v922, %v918
        %v963 = vpack.c.b16 %v927, %v923
        %v964 = vpack.c.b16 %v928, %v924
        %v965 = vpack.c.b16 %v929, %v925
        %v966 = vpack.c.b16 %v930, %v926
        %v967 = vpack.c.b16 %v935, %v931
        %v968 = vpack.c.b16 %v936, %v932
        %v969 = vpack.c.b16 %v937, %v933
        %v970 = vpack.c.b16 %v938, %v934
        %1003 = vmatprep.subr.bf16.mxu0 %v940
        %1004 = vmatpush1.bf16.msra.mxu0 %v939
        %1005 = vmatprep.subr.bf16.mxu0 %v944
        %1006 = vmatpush1.bf16.msra.mxu0 %v943
        %1007 = vmatprep.subr.bf16.mxu0 %v948
        %1008 = vmatpush1.bf16.msra.mxu0 %v947
        %1009 = vmatprep.subr.bf16.mxu0 %v952
        %1010 = vmatpush1.bf16.msra.mxu0 %v951
        %1011 = vmatprep.subr.bf16.mxu0 %v956
        %1012 = vmatpush1.bf16.msra.mxu0 %v955
        %1013 = vmatprep.subr.bf16.mxu0 %v960
        %1014 = vmatpush1.bf16.msra.mxu0 %v959
        %1015 = vmatprep.subr.bf16.mxu0 %v964
        %1016 = vmatpush1.bf16.msra.mxu0 %v963
        %1017 = vmatprep.subr.bf16.mxu0 %v968
        %1018 = vmatpush1.bf16.msra.mxu0 %v967
        %1019 = vmatprep.subr.bf16.mxu0 0
        %1020 = vmatpush1.bf16.msra.mxu0 0
        %1021 = vmatprep.subr.bf16.mxu0 0
        %1022 = vmatpush1.bf16.msra.mxu0 0
        %1023 = vmatprep.subr.bf16.mxu0 0
        %1024 = vmatpush1.bf16.msra.mxu0 0
        %1025 = vmatprep.subr.bf16.mxu0 0
        %1026 = vmatpush1.bf16.msra.mxu0 0
        %1027 = vmatprep.subr.bf16.mxu0 0
        %1028 = vmatpush1.bf16.msra.mxu0 0
        %1029 = vmatprep.subr.bf16.mxu0 0
        %1030 = vmatpush1.bf16.msra.mxu0 0
        %1031 = vmatprep.subr.bf16.mxu0 0
        %1032 = vmatpush1.bf16.msra.mxu0 0
        %1033 = vmatprep.subr.bf16.mxu0 0
        %1034 = vmatpush1.bf16.msra.mxu0 0
        %1035 = vmatprep.mubr.bf16.mxu0 0
        %1036 = vmatmul.mubr.bf16.gmra.mrb[0].mxu0 %v841
        %v1037 = vpop.f32.mrb[0].mxu0
        %v1038 = vadd.f32 %v786, %v1037
        %v1039 = vpop.f32.mrb[0].mxu0
        %v1040 = vadd.f32 %v788, %v1039
        %v1041 = vpop.f32.mrb[0].mxu0
        %v1042 = vadd.f32 %v790, %v1041
        %v1043 = vpop.f32.mrb[0].mxu0
        %v1044 = vadd.f32 %v792, %v1043
        %1045 = vdwg.mxu0
        %1046 = vmatprep.subr.bf16.mxu0 %v942
        %1047 = vmatpush1.bf16.msra.mxu0 %v941
        %1048 = vmatprep.subr.bf16.mxu0 %v946
        %1049 = vmatpush1.bf16.msra.mxu0 %v945
        %1050 = vmatprep.subr.bf16.mxu0 %v950
        %1051 = vmatpush1.bf16.msra.mxu0 %v949
        %1052 = vmatprep.subr.bf16.mxu0 %v954
        %1053 = vmatpush1.bf16.msra.mxu0 %v953
        %1054 = vmatprep.subr.bf16.mxu0 %v958
        %1055 = vmatpush1.bf16.msra.mxu0 %v957
        %1056 = vmatprep.subr.bf16.mxu0 %v962
        %1057 = vmatpush1.bf16.msra.mxu0 %v961
        %1058 = vmatprep.subr.bf16.mxu0 %v966
        %1059 = vmatpush1.bf16.msra.mxu0 %v965
        %1060 = vmatprep.subr.bf16.mxu0 %v970
        %1061 = vmatpush1.bf16.msra.mxu0 %v969
        %1062 = vmatprep.subr.bf16.mxu0 0
        %1063 = vmatpush1.bf16.msra.mxu0 0
        %1064 = vmatprep.subr.bf16.mxu0 0
        %1065 = vmatpush1.bf16.msra.mxu0 0
        %1066 = vmatprep.subr.bf16.mxu0 0
        %1067 = vmatpush1.bf16.msra.mxu0 0
        %1068 = vmatprep.subr.bf16.mxu0 0
        %1069 = vmatpush1.bf16.msra.mxu0 0
        %1070 = vmatprep.subr.bf16.mxu0 0
        %1071 = vmatpush1.bf16.msra.mxu0 0
        %1072 = vmatprep.subr.bf16.mxu0 0
        %1073 = vmatpush1.bf16.msra.mxu0 0
        %1074 = vmatprep.subr.bf16.mxu0 0
        %1075 = vmatpush1.bf16.msra.mxu0 0
        %1076 = vmatprep.subr.bf16.mxu0 0
        %1077 = vmatpush1.bf16.msra.mxu0 0
        %1078 = vmatprep.mubr.bf16.mxu0 0
        %1079 = vmatmul.mubr.bf16.gmra.mrb[0].mxu0 %v841
        %v1080 = vpop.f32.mrb[0].mxu0
        %v1081 = vadd.f32 %v829, %v1080
        %v1082 = vpop.f32.mrb[0].mxu0
        %v1083 = vadd.f32 %v831, %v1082
        %v1084 = vpop.f32.mrb[0].mxu0
        %v1085 = vadd.f32 %v833, %v1084
        %v1086 = vpop.f32.mrb[0].mxu0
        %v1087 = vadd.f32 %v835, %v1086
        %1088 = vdwg.mxu0
        %v1090 = vlaneseq
        %v1091 = vshrl.u32 %v1090, 7
        %v1092 = vsub.s32 0, %v1091
        %v1093 = vrot.slane %v583, %v1092
        %v1094 = vlaneseq
        %v1095 = vshrl.u32 %v1094, 7
        %v1096 = vsub.s32 1, %v1095
        %v1097 = vrot.slane %v583, %v1096
        %v1098 = vlaneseq
        %v1099 = vshrl.u32 %v1098, 7
        %v1100 = vsub.s32 2, %v1099
        %v1101 = vrot.slane %v583, %v1100
        %v1102 = vlaneseq
        %v1103 = vshrl.u32 %v1102, 7
        %v1104 = vsub.s32 3, %v1103
        %v1105 = vrot.slane %v583, %v1104
        %v1110 = vadd.f32 %v1038, %v1093
        %v1111 = vadd.f32 %v1040, %v1097
        %v1112 = vadd.f32 %v1081, %v1101
        %v1113 = vadd.f32 %v1083, %v1105
        %v1114 = vadd.f32 %v1042, %v1093
        %v1115 = vadd.f32 %v1044, %v1097
        %v1116 = vadd.f32 %v1085, %v1101
        %v1117 = vadd.f32 %v1087, %v1105
        %v1118 = vpack.c.bf16 %v587, %v586
        %v1135 = vunpack.c.l.b16 %v551
        %v1136 = vunpack.c.h.b16 %v551
        %v1137 = vunpack.c.l.b16 %v552
        %v1138 = vunpack.c.h.b16 %v552
        %v1139 = vunpack.c.l.b16 %v553
        %v1140 = vunpack.c.h.b16 %v553
        %v1141 = vunpack.c.l.b16 %v554
        %v1142 = vunpack.c.h.b16 %v554
        %v1143 = vunpack.c.l.b16 %v555
        %v1144 = vunpack.c.h.b16 %v555
        %v1145 = vunpack.c.l.b16 %v556
        %v1146 = vunpack.c.h.b16 %v556
        %v1147 = vunpack.c.l.b16 %v557
        %v1148 = vunpack.c.h.b16 %v557
        %v1149 = vunpack.c.l.b16 %v558
        %v1150 = vunpack.c.h.b16 %v558
        %v1151 = vunpack.c.l.b16 %v559
        %v1152 = vunpack.c.h.b16 %v559
        %v1153 = vunpack.c.l.b16 %v560
        %v1154 = vunpack.c.h.b16 %v560
        %v1155 = vunpack.c.l.b16 %v561
        %v1156 = vunpack.c.h.b16 %v561
        %v1157 = vunpack.c.l.b16 %v562
        %v1158 = vunpack.c.h.b16 %v562
        %v1159 = vunpack.c.l.b16 %v563
        %v1160 = vunpack.c.h.b16 %v563
        %v1161 = vunpack.c.l.b16 %v564
        %v1162 = vunpack.c.h.b16 %v564
        %v1163 = vunpack.c.l.b16 %v565
        %v1164 = vunpack.c.h.b16 %v565
        %v1165 = vunpack.c.l.b16 %v566
        %v1166 = vunpack.c.h.b16 %v566
        %v1167 = vpack.c.b16 %v1137, %v1135
        %v1168 = vpack.c.b16 %v1138, %v1136
        %v1169 = vpack.c.b16 %v1141, %v1139
        %v1170 = vpack.c.b16 %v1142, %v1140
        %v1171 = vpack.c.b16 %v1145, %v1143
        %v1172 = vpack.c.b16 %v1146, %v1144
        %v1173 = vpack.c.b16 %v1149, %v1147
        %v1174 = vpack.c.b16 %v1150, %v1148
        %v1175 = vpack.c.b16 %v1153, %v1151
        %v1176 = vpack.c.b16 %v1154, %v1152
        %v1177 = vpack.c.b16 %v1157, %v1155
        %v1178 = vpack.c.b16 %v1158, %v1156
        %v1179 = vpack.c.b16 %v1161, %v1159
        %v1180 = vpack.c.b16 %v1162, %v1160
        %v1181 = vpack.c.b16 %v1165, %v1163
        %v1182 = vpack.c.b16 %v1166, %v1164
        %1199 = vmatprep.subr.bf16.mxu0 %v1168
        %1200 = vmatpush1.bf16.msra.mxu0 %v1167
        %1201 = vmatprep.subr.bf16.mxu0 %v1170
        %1202 = vmatpush1.bf16.msra.mxu0 %v1169
        %1203 = vmatprep.subr.bf16.mxu0 %v1172
        %1204 = vmatpush1.bf16.msra.mxu0 %v1171
        %1205 = vmatprep.subr.bf16.mxu0 %v1174
        %1206 = vmatpush1.bf16.msra.mxu0 %v1173
        %1207 = vmatprep.subr.bf16.mxu0 %v1176
        %1208 = vmatpush1.bf16.msra.mxu0 %v1175
        %1209 = vmatprep.subr.bf16.mxu0 %v1178
        %1210 = vmatpush1.bf16.msra.mxu0 %v1177
        %1211 = vmatprep.subr.bf16.mxu0 %v1180
        %1212 = vmatpush1.bf16.msra.mxu0 %v1179
        %1213 = vmatprep.subr.bf16.mxu0 %v1182
        %1214 = vmatpush1.bf16.msra.mxu0 %v1181
        %1215 = vmatprep.subr.bf16.mxu0 0
        %1216 = vmatpush1.bf16.msra.mxu0 0
        %1217 = vmatprep.subr.bf16.mxu0 0
        %1218 = vmatpush1.bf16.msra.mxu0 0
        %1219 = vmatprep.subr.bf16.mxu0 0
        %1220 = vmatpush1.bf16.msra.mxu0 0
        %1221 = vmatprep.subr.bf16.mxu0 0
        %1222 = vmatpush1.bf16.msra.mxu0 0
        %1223 = vmatprep.subr.bf16.mxu0 0
        %1224 = vmatpush1.bf16.msra.mxu0 0
        %1225 = vmatprep.subr.bf16.mxu0 0
        %1226 = vmatpush1.bf16.msra.mxu0 0
        %1227 = vmatprep.subr.bf16.mxu0 0
        %1228 = vmatpush1.bf16.msra.mxu0 0
        %1229 = vmatprep.subr.bf16.mxu0 0
        %1230 = vmatpush1.bf16.msra.mxu0 0
        %1231 = vmatprep.mubr.bf16.mxu0 0
        %1232 = vmatmul.mubr.bf16.gmra.mrb[0].mxu0 %v1118
        %v1233 = vpop.f32.mrb[0].mxu0
        %v1234 = vadd.f32 0.0, %v1233
        %v1235 = vpop.f32.mrb[0].mxu0
        %v1236 = vadd.f32 0.0, %v1235
        %v1237 = vpop.f32.mrb[0].mxu0
        %v1238 = vadd.f32 0.0, %v1237
        %v1239 = vpop.f32.mrb[0].mxu0
        %v1240 = vadd.f32 0.0, %v1239
        %1241 = vdwg.mxu0
        %v1242 = vadd.f32 %v1110, %v1234
        %v1243 = vadd.f32 %v1114, %v1238
        %v1244 = vmul.f32 %v1242, 0.5
        %v1245 = vmul.f32 %v1243, 0.5
        %v1246 = vtanh.pop %v1244
        %v1247 = vtanh.pop %v1245
        %v1248 = vmul.f32 %v1246, 0.5
        %v1249 = vmul.f32 %v1247, 0.5
        %v1250 = vadd.f32 %v1248, 0.5
        %v1251 = vadd.f32 %v1249, 0.5
        %v1252 = vadd.f32 %v1111, %v1236
        %v1253 = vadd.f32 %v1115, %v1240
        %v1254 = vmul.f32 %v1252, 0.5
        %v1255 = vmul.f32 %v1253, 0.5
        %v1256 = vtanh.pop %v1254
        %v1257 = vtanh.pop %v1255
        %v1258 = vmul.f32 %v1256, 0.5
        %v1259 = vmul.f32 %v1257, 0.5
        %v1260 = vadd.f32 %v1258, 0.5
        %v1261 = vadd.f32 %v1259, 0.5
        %v1262 = vtanh.pop %v1113
        %v1263 = vtanh.pop %v1117
        %v1264 = vmul.f32 %v1260, %v586
        %v1265 = vmul.f32 %v1261, %v587
        %v1266 = vmul.f32 %v1250, %v1262
        %v1267 = vmul.f32 %v1251, %v1263
        %v1268 = vadd.f32 %v1264, %v1266
        %v1269 = vadd.f32 %v1265, %v1267
        %v1270 = vpack.c.bf16 %v1269, %v1268
        %v1287 = vunpack.c.l.b16 %v567
        %v1288 = vunpack.c.l.b16 %v568
        %v1289 = vunpack.c.l.b16 %v569
        %v1290 = vunpack.c.l.b16 %v570
        %v1291 = vunpack.c.l.b16 %v571
        %v1292 = vunpack.c.l.b16 %v572
        %v1293 = vunpack.c.l.b16 %v573
        %v1294 = vunpack.c.l.b16 %v574
        %v1295 = vunpack.c.l.b16 %v575
        %v1296 = vunpack.c.l.b16 %v576
        %v1297 = vunpack.c.l.b16 %v577
        %v1298 = vunpack.c.l.b16 %v578
        %v1299 = vunpack.c.l.b16 %v579
        %v1300 = vunpack.c.l.b16 %v580
        %v1301 = vunpack.c.l.b16 %v581
        %v1302 = vunpack.c.l.b16 %v582
        %v1303 = vpack.c.b16 %v1288, %v1287
        %v1304 = vpack.c.b16 %v1290, %v1289
        %v1305 = vpack.c.b16 %v1292, %v1291
        %v1306 = vpack.c.b16 %v1294, %v1293
        %v1307 = vpack.c.b16 %v1296, %v1295
        %v1308 = vpack.c.b16 %v1298, %v1297
        %v1309 = vpack.c.b16 %v1300, %v1299
        %v1310 = vpack.c.b16 %v1302, %v1301
        %1319 = vmatprep.subr.bf16.mxu0 0
        %1320 = vmatpush1.bf16.msra.mxu0 %v1303
        %1321 = vmatprep.subr.bf16.mxu0 0
        %1322 = vmatpush1.bf16.msra.mxu0 %v1304
        %1323 = vmatprep.subr.bf16.mxu0 0
        %1324 = vmatpush1.bf16.msra.mxu0 %v1305
        %1325 = vmatprep.subr.bf16.mxu0 0
        %1326 = vmatpush1.bf16.msra.mxu0 %v1306
        %1327 = vmatprep.subr.bf16.mxu0 0
        %1328 = vmatpush1.bf16.msra.mxu0 %v1307
        %1329 = vmatprep.subr.bf16.mxu0 0
        %1330 = vmatpush1.bf16.msra.mxu0 %v1308
        %1331 = vmatprep.subr.bf16.mxu0 0
        %1332 = vmatpush1.bf16.msra.mxu0 %v1309
        %1333 = vmatprep.subr.bf16.mxu0 0
        %1334 = vmatpush1.bf16.msra.mxu0 %v1310
        %1335 = vmatprep.subr.bf16.mxu0 0
        %1336 = vmatpush1.bf16.msra.mxu0 0
        %1337 = vmatprep.subr.bf16.mxu0 0
        %1338 = vmatpush1.bf16.msra.mxu0 0
        %1339 = vmatprep.subr.bf16.mxu0 0
        %1340 = vmatpush1.bf16.msra.mxu0 0
        %1341 = vmatprep.subr.bf16.mxu0 0
        %1342 = vmatpush1.bf16.msra.mxu0 0
        %1343 = vmatprep.subr.bf16.mxu0 0
        %1344 = vmatpush1.bf16.msra.mxu0 0
        %1345 = vmatprep.subr.bf16.mxu0 0
        %1346 = vmatpush1.bf16.msra.mxu0 0
        %1347 = vmatprep.subr.bf16.mxu0 0
        %1348 = vmatpush1.bf16.msra.mxu0 0
        %1349 = vmatprep.subr.bf16.mxu0 0
        %1350 = vmatpush1.bf16.msra.mxu0 0
        %1351 = vmatprep.mubr.bf16.mxu0 0
        %1352 = vmatmul.mubr.bf16.gmra.mrb[0].mxu0 %v1270
        %v1353 = vpop.f32.mrb[0].mxu0
        %v1354 = vadd.f32 0.0, %v1353
        %v1355 = vpop.f32.mrb[0].mxu0
        %v1356 = vpop.f32.mrb[0].mxu0
        %v1357 = vadd.f32 0.0, %v1356
        %v1358 = vpop.f32.mrb[0].mxu0
        %1359 = vdwg.mxu0
        %v1360 = vadd.f32 %v1112, %v1354
        %v1361 = vadd.f32 %v1116, %v1357
        %v1362 = vmul.f32 %v1360, 0.5
        %v1363 = vmul.f32 %v1361, 0.5
        %v1364 = vtanh.pop %v1362
        %v1365 = vtanh.pop %v1363
        %v1366 = vmul.f32 %v1364, 0.5
        %v1367 = vmul.f32 %v1365, 0.5
        %v1368 = vadd.f32 %v1366, 0.5
        %v1369 = vadd.f32 %v1367, 0.5
        %v1370 = vmul.f32 %v1368, %v1268
        %v1371 = vmul.f32 %v1369, %v1269
        %s1372 = scalar_lea.vmem %s414, 8 [#allocation4]
        %v1373 = vld [vmem:[%s1372] sm:$0xf]
        %v1374 = vld [vmem:[%s1372 + $0x4] sm:$0xf]
        %v1375 = vpack.c.bf16 %v1371, %v1370
        %1376 = vmatprep.subr.bf16.mxu0 %v688
        %1377 = vmatpush1.bf16.msra.mxu0 %v687
        %1378 = vmatprep.subr.bf16.mxu0 %v692
        %1379 = vmatpush1.bf16.msra.mxu0 %v691
        %1380 = vmatprep.subr.bf16.mxu0 %v696
        %1381 = vmatpush1.bf16.msra.mxu0 %v695
        %1382 = vmatprep.subr.bf16.mxu0 %v700
        %1383 = vmatpush1.bf16.msra.mxu0 %v699
        %1384 = vmatprep.subr.bf16.mxu0 %v704
        %1385 = vmatpush1.bf16.msra.mxu0 %v703
        %1386 = vmatprep.subr.bf16.mxu0 %v708
        %1387 = vmatpush1.bf16.msra.mxu0 %v707
        %1388 = vmatprep.subr.bf16.mxu0 %v712
        %1389 = vmatpush1.bf16.msra.mxu0 %v711
        %1390 = vmatprep.subr.bf16.mxu0 %v716
        %1391 = vmatpush1.bf16.msra.mxu0 %v715
        %1392 = vmatprep.subr.bf16.mxu0 0
        %1393 = vmatpush1.bf16.msra.mxu0 0
        %1394 = vmatprep.subr.bf16.mxu0 0
        %1395 = vmatpush1.bf16.msra.mxu0 0
        %1396 = vmatprep.subr.bf16.mxu0 0
        %1397 = vmatpush1.bf16.msra.mxu0 0
        %1398 = vmatprep.subr.bf16.mxu0 0
        %1399 = vmatpush1.bf16.msra.mxu0 0
        %1400 = vmatprep.subr.bf16.mxu0 0
        %1401 = vmatpush1.bf16.msra.mxu0 0
        %1402 = vmatprep.subr.bf16.mxu0 0
        %1403 = vmatpush1.bf16.msra.mxu0 0
        %1404 = vmatprep.subr.bf16.mxu0 0
        %1405 = vmatpush1.bf16.msra.mxu0 0
        %1406 = vmatprep.subr.bf16.mxu0 0
        %1407 = vmatpush1.bf16.msra.mxu0 0
        %1408 = vmatprep.mubr.bf16.mxu0 0
        %1409 = vmatmul.mubr.bf16.gmra.mrb[0].mxu0 %v1375
        %v1410 = vpop.f32.mrb[0].mxu0
        %v1411 = vadd.f32 0.0, %v1410
        %v1412 = vpop.f32.mrb[0].mxu0
        %v1413 = vadd.f32 0.0, %v1412
        %v1414 = vpop.f32.mrb[0].mxu0
        %v1415 = vadd.f32 0.0, %v1414
        %v1416 = vpop.f32.mrb[0].mxu0
        %v1417 = vadd.f32 0.0, %v1416
        %1418 = vdwg.mxu0
        %1419 = vmatprep.subr.bf16.mxu0 %v690
        %1420 = vmatpush1.bf16.msra.mxu0 %v689
        %1421 = vmatprep.subr.bf16.mxu0 %v694
        %1422 = vmatpush1.bf16.msra.mxu0 %v693
        %1423 = vmatprep.subr.bf16.mxu0 %v698
        %1424 = vmatpush1.bf16.msra.mxu0 %v697
        %1425 = vmatprep.subr.bf16.mxu0 %v702
        %1426 = vmatpush1.bf16.msra.mxu0 %v701
        %1427 = vmatprep.subr.bf16.mxu0 %v706
        %1428 = vmatpush1.bf16.msra.mxu0 %v705
        %1429 = vmatprep.subr.bf16.mxu0 %v710
        %1430 = vmatpush1.bf16.msra.mxu0 %v709
        %1431 = vmatprep.subr.bf16.mxu0 %v714
        %1432 = vmatpush1.bf16.msra.mxu0 %v713
        %1433 = vmatprep.subr.bf16.mxu0 %v718
        %1434 = vmatpush1.bf16.msra.mxu0 %v717
        %1435 = vmatprep.subr.bf16.mxu0 0
        %1436 = vmatpush1.bf16.msra.mxu0 0
        %1437 = vmatprep.subr.bf16.mxu0 0
        %1438 = vmatpush1.bf16.msra.mxu0 0
        %1439 = vmatprep.subr.bf16.mxu0 0
        %1440 = vmatpush1.bf16.msra.mxu0 0
        %1441 = vmatprep.subr.bf16.mxu0 0
        %1442 = vmatpush1.bf16.msra.mxu0 0
        %1443 = vmatprep.subr.bf16.mxu0 0
        %1444 = vmatpush1.bf16.msra.mxu0 0
        %1445 = vmatprep.subr.bf16.mxu0 0
        %1446 = vmatpush1.bf16.msra.mxu0 0
        %1447 = vmatprep.subr.bf16.mxu0 0
        %1448 = vmatpush1.bf16.msra.mxu0 0
        %1449 = vmatprep.subr.bf16.mxu0 0
        %1450 = vmatpush1.bf16.msra.mxu0 0
        %1451 = vmatprep.mubr.bf16.mxu0 0
        %1452 = vmatmul.mubr.bf16.gmra.mrb[0].mxu0 %v1375
        %v1453 = vpop.f32.mrb[0].mxu0
        %v1454 = vadd.f32 0.0, %v1453
        %v1455 = vpop.f32.mrb[0].mxu0
        %v1456 = vadd.f32 0.0, %v1455
        %v1457 = vpop.f32.mrb[0].mxu0
        %v1458 = vadd.f32 0.0, %v1457
        %v1459 = vpop.f32.mrb[0].mxu0
        %v1460 = vadd.f32 0.0, %v1459
        %1461 = vdwg.mxu0
        %v1464 = vunpack.c.l.b16 %v1373
        %v1465 = vunpack.c.l.b16 %v1374
        %v1466 = vpack.c.b16 %v1465, %v1464
        %1468 = vmatprep.subr.bf16.mxu0 %v940
        %1469 = vmatpush1.bf16.msra.mxu0 %v939
        %1470 = vmatprep.subr.bf16.mxu0 %v944
        %1471 = vmatpush1.bf16.msra.mxu0 %v943
        %1472 = vmatprep.subr.bf16.mxu0 %v948
        %1473 = vmatpush1.bf16.msra.mxu0 %v947
        %1474 = vmatprep.subr.bf16.mxu0 %v952
        %1475 = vmatpush1.bf16.msra.mxu0 %v951
        %1476 = vmatprep.subr.bf16.mxu0 %v956
        %1477 = vmatpush1.bf16.msra.mxu0 %v955
        %1478 = vmatprep.subr.bf16.mxu0 %v960
        %1479 = vmatpush1.bf16.msra.mxu0 %v959
        %1480 = vmatprep.subr.bf16.mxu0 %v964
        %1481 = vmatpush1.bf16.msra.mxu0 %v963
        %1482 = vmatprep.subr.bf16.mxu0 %v968
        %1483 = vmatpush1.bf16.msra.mxu0 %v967
        %1484 = vmatprep.subr.bf16.mxu0 0
        %1485 = vmatpush1.bf16.msra.mxu0 0
        %1486 = vmatprep.subr.bf16.mxu0 0
        %1487 = vmatpush1.bf16.msra.mxu0 0
        %1488 = vmatprep.subr.bf16.mxu0 0
        %1489 = vmatpush1.bf16.msra.mxu0 0
        %1490 = vmatprep.subr.bf16.mxu0 0
        %1491 = vmatpush1.bf16.msra.mxu0 0
        %1492 = vmatprep.subr.bf16.mxu0 0
        %1493 = vmatpush1.bf16.msra.mxu0 0
        %1494 = vmatprep.subr.bf16.mxu0 0
        %1495 = vmatpush1.bf16.msra.mxu0 0
        %1496 = vmatprep.subr.bf16.mxu0 0
        %1497 = vmatpush1.bf16.msra.mxu0 0
        %1498 = vmatprep.subr.bf16.mxu0 0
        %1499 = vmatpush1.bf16.msra.mxu0 0
        %1500 = vmatprep.mubr.bf16.mxu0 0
        %1501 = vmatmul.mubr.bf16.gmra.mrb[0].mxu0 %v1466
        %v1502 = vpop.f32.mrb[0].mxu0
        %v1503 = vadd.f32 %v1411, %v1502
        %v1504 = vpop.f32.mrb[0].mxu0
        %v1505 = vadd.f32 %v1413, %v1504
        %v1506 = vpop.f32.mrb[0].mxu0
        %v1507 = vadd.f32 %v1415, %v1506
        %v1508 = vpop.f32.mrb[0].mxu0
        %v1509 = vadd.f32 %v1417, %v1508
        %1510 = vdwg.mxu0
        %1511 = vmatprep.subr.bf16.mxu0 %v942
        %1512 = vmatpush1.bf16.msra.mxu0 %v941
        %1513 = vmatprep.subr.bf16.mxu0 %v946
        %1514 = vmatpush1.bf16.msra.mxu0 %v945
        %1515 = vmatprep.subr.bf16.mxu0 %v950
        %1516 = vmatpush1.bf16.msra.mxu0 %v949
        %1517 = vmatprep.subr.bf16.mxu0 %v954
        %1518 = vmatpush1.bf16.msra.mxu0 %v953
        %1519 = vmatprep.subr.bf16.mxu0 %v958
        %1520 = vmatpush1.bf16.msra.mxu0 %v957
        %1521 = vmatprep.subr.bf16.mxu0 %v962
        %1522 = vmatpush1.bf16.msra.mxu0 %v961
        %1523 = vmatprep.subr.bf16.mxu0 %v966
        %1524 = vmatpush1.bf16.msra.mxu0 %v965
        %1525 = vmatprep.subr.bf16.mxu0 %v970
        %1526 = vmatpush1.bf16.msra.mxu0 %v969
        %1527 = vmatprep.subr.bf16.mxu0 0
        %1528 = vmatpush1.bf16.msra.mxu0 0
        %1529 = vmatprep.subr.bf16.mxu0 0
        %1530 = vmatpush1.bf16.msra.mxu0 0
        %1531 = vmatprep.subr.bf16.mxu0 0
        %1532 = vmatpush1.bf16.msra.mxu0 0
        %1533 = vmatprep.subr.bf16.mxu0 0
        %1534 = vmatpush1.bf16.msra.mxu0 0
        %1535 = vmatprep.subr.bf16.mxu0 0
        %1536 = vmatpush1.bf16.msra.mxu0 0
        %1537 = vmatprep.subr.bf16.mxu0 0
        %1538 = vmatpush1.bf16.msra.mxu0 0
        %1539 = vmatprep.subr.bf16.mxu0 0
        %1540 = vmatpush1.bf16.msra.mxu0 0
        %1541 = vmatprep.subr.bf16.mxu0 0
        %1542 = vmatpush1.bf16.msra.mxu0 0
        %1543 = vmatprep.mubr.bf16.mxu0 0
        %1544 = vmatmul.mubr.bf16.gmra.mrb[0].mxu0 %v1466
        %v1545 = vpop.f32.mrb[0].mxu0
        %v1546 = vadd.f32 %v1454, %v1545
        %v1547 = vpop.f32.mrb[0].mxu0
        %v1548 = vadd.f32 %v1456, %v1547
        %v1549 = vpop.f32.mrb[0].mxu0
        %v1550 = vadd.f32 %v1458, %v1549
        %v1551 = vpop.f32.mrb[0].mxu0
        %v1552 = vadd.f32 %v1460, %v1551
        %1553 = vdwg.mxu0
        %v1554 = vadd.f32 %v1503, %v1093
        %v1555 = vadd.f32 %v1505, %v1097
        %v1556 = vadd.f32 %v1546, %v1101
        %v1557 = vadd.f32 %v1548, %v1105
        %v1558 = vadd.f32 %v1507, %v1093
        %v1559 = vadd.f32 %v1509, %v1097
        %v1560 = vadd.f32 %v1550, %v1101
        %v1561 = vadd.f32 %v1552, %v1105
        %1562 = vmatprep.subr.bf16.mxu0 %v1168
        %1563 = vmatpush1.bf16.msra.mxu0 %v1167
        %1564 = vmatprep.subr.bf16.mxu0 %v1170
        %1565 = vmatpush1.bf16.msra.mxu0 %v1169
        %1566 = vmatprep.subr.bf16.mxu0 %v1172
        %1567 = vmatpush1.bf16.msra.mxu0 %v1171
        %1568 = vmatprep.subr.bf16.mxu0 %v1174
        %1569 = vmatpush1.bf16.msra.mxu0 %v1173
        %1570 = vmatprep.subr.bf16.mxu0 %v1176
        %1571 = vmatpush1.bf16.msra.mxu0 %v1175
        %1572 = vmatprep.subr.bf16.mxu0 %v1178
        %1573 = vmatpush1.bf16.msra.mxu0 %v1177
        %1574 = vmatprep.subr.bf16.mxu0 %v1180
        %1575 = vmatpush1.bf16.msra.mxu0 %v1179
        %1576 = vmatprep.subr.bf16.mxu0 %v1182
        %1577 = vmatpush1.bf16.msra.mxu0 %v1181
        %1578 = vmatprep.subr.bf16.mxu0 0
        %1579 = vmatpush1.bf16.msra.mxu0 0
        %1580 = vmatprep.subr.bf16.mxu0 0
        %1581 = vmatpush1.bf16.msra.mxu0 0
        %1582 = vmatprep.subr.bf16.mxu0 0
        %1583 = vmatpush1.bf16.msra.mxu0 0
        %1584 = vmatprep.subr.bf16.mxu0 0
        %1585 = vmatpush1.bf16.msra.mxu0 0
        %1586 = vmatprep.subr.bf16.mxu0 0
        %1587 = vmatpush1.bf16.msra.mxu0 0
        %1588 = vmatprep.subr.bf16.mxu0 0
        %1589 = vmatpush1.bf16.msra.mxu0 0
        %1590 = vmatprep.subr.bf16.mxu0 0
        %1591 = vmatpush1.bf16.msra.mxu0 0
        %1592 = vmatprep.subr.bf16.mxu0 0
        %1593 = vmatpush1.bf16.msra.mxu0 0
        %1594 = vmatprep.mubr.bf16.mxu0 0
        %1595 = vmatmul.mubr.bf16.gmra.mrb[0].mxu0 %v1270
        %v1596 = vpop.f32.mrb[0].mxu0
        %v1597 = vadd.f32 0.0, %v1596
        %v1598 = vpop.f32.mrb[0].mxu0
        %v1599 = vadd.f32 0.0, %v1598
        %v1600 = vpop.f32.mrb[0].mxu0
        %v1601 = vadd.f32 0.0, %v1600
        %v1602 = vpop.f32.mrb[0].mxu0
        %v1603 = vadd.f32 0.0, %v1602
        %1604 = vdwg.mxu0
        %v1605 = vadd.f32 %v1554, %v1597
        %v1606 = vadd.f32 %v1558, %v1601
        %v1607 = vmul.f32 %v1605, 0.5
        %v1608 = vmul.f32 %v1606, 0.5
        %v1609 = vtanh.pop %v1607
        %v1610 = vtanh.pop %v1608
        %v1611 = vmul.f32 %v1609, 0.5
        %v1612 = vmul.f32 %v1610, 0.5
        %v1613 = vadd.f32 %v1611, 0.5
        %v1614 = vadd.f32 %v1612, 0.5
        %v1615 = vadd.f32 %v1555, %v1599
        %v1616 = vadd.f32 %v1559, %v1603
        %v1617 = vmul.f32 %v1615, 0.5
        %v1618 = vmul.f32 %v1616, 0.5
        %v1619 = vtanh.pop %v1617
        %v1620 = vtanh.pop %v1618
        %v1621 = vmul.f32 %v1619, 0.5
        %v1622 = vmul.f32 %v1620, 0.5
        %v1623 = vadd.f32 %v1621, 0.5
        %v1624 = vadd.f32 %v1622, 0.5
        %v1625 = vtanh.pop %v1557
        %v1626 = vtanh.pop %v1561
        %v1627 = vmul.f32 %v1623, %v1268
        %v1628 = vmul.f32 %v1624, %v1269
        %v1629 = vmul.f32 %v1613, %v1625
        %v1630 = vmul.f32 %v1614, %v1626
        %v1631 = vadd.f32 %v1627, %v1629
        %v1632 = vadd.f32 %v1628, %v1630
        %v1633 = vpack.c.bf16 %v1632, %v1631
        %1634 = vmatprep.subr.bf16.mxu0 0
        %1635 = vmatpush1.bf16.msra.mxu0 %v1303
        %1636 = vmatprep.subr.bf16.mxu0 0
        %1637 = vmatpush1.bf16.msra.mxu0 %v1304
        %1638 = vmatprep.subr.bf16.mxu0 0
        %1639 = vmatpush1.bf16.msra.mxu0 %v1305
        %1640 = vmatprep.subr.bf16.mxu0 0
        %1641 = vmatpush1.bf16.msra.mxu0 %v1306
        %1642 = vmatprep.subr.bf16.mxu0 0
        %1643 = vmatpush1.bf16.msra.mxu0 %v1307
        %1644 = vmatprep.subr.bf16.mxu0 0
        %1645 = vmatpush1.bf16.msra.mxu0 %v1308
        %1646 = vmatprep.subr.bf16.mxu0 0
        %1647 = vmatpush1.bf16.msra.mxu0 %v1309
        %1648 = vmatprep.subr.bf16.mxu0 0
        %1649 = vmatpush1.bf16.msra.mxu0 %v1310
        %1650 = vmatprep.subr.bf16.mxu0 0
        %1651 = vmatpush1.bf16.msra.mxu0 0
        %1652 = vmatprep.subr.bf16.mxu0 0
        %1653 = vmatpush1.bf16.msra.mxu0 0
        %1654 = vmatprep.subr.bf16.mxu0 0
        %1655 = vmatpush1.bf16.msra.mxu0 0
        %1656 = vmatprep.subr.bf16.mxu0 0
        %1657 = vmatpush1.bf16.msra.mxu0 0
        %1658 = vmatprep.subr.bf16.mxu0 0
        %1659 = vmatpush1.bf16.msra.mxu0 0
        %1660 = vmatprep.subr.bf16.mxu0 0
        %1661 = vmatpush1.bf16.msra.mxu0 0
        %1662 = vmatprep.subr.bf16.mxu0 0
        %1663 = vmatpush1.bf16.msra.mxu0 0
        %1664 = vmatprep.subr.bf16.mxu0 0
        %1665 = vmatpush1.bf16.msra.mxu0 0
        %1666 = vmatprep.mubr.bf16.mxu0 0
        %1667 = vmatmul.mubr.bf16.gmra.mrb[0].mxu0 %v1633
        %v1668 = vpop.f32.mrb[0].mxu0
        %v1669 = vadd.f32 0.0, %v1668
        %v1670 = vpop.f32.mrb[0].mxu0
        %v1671 = vpop.f32.mrb[0].mxu0
        %v1672 = vadd.f32 0.0, %v1671
        %v1673 = vpop.f32.mrb[0].mxu0
        %1674 = vdwg.mxu0
        %v1675 = vadd.f32 %v1556, %v1669
        %v1676 = vadd.f32 %v1560, %v1672
        %v1677 = vmul.f32 %v1675, 0.5
        %v1678 = vmul.f32 %v1676, 0.5
        %v1679 = vtanh.pop %v1677
        %v1680 = vtanh.pop %v1678
        %v1681 = vmul.f32 %v1679, 0.5
        %v1682 = vmul.f32 %v1680, 0.5
        %v1683 = vadd.f32 %v1681, 0.5
        %v1684 = vadd.f32 %v1682, 0.5
        %v1685 = vmul.f32 %v1683, %v1631
        %v1686 = vmul.f32 %v1684, %v1632
        %s1687 = scalar_lea.vmem %s414, 16 [#allocation4]
        %v1688 = vld [vmem:[%s1687] sm:$0xf]
        %v1689 = vld [vmem:[%s1687 + $0x4] sm:$0xf]
        %v1690 = vpack.c.bf16 %v1686, %v1685
        %1691 = vmatprep.subr.bf16.mxu0 %v688
        %1692 = vmatpush1.bf16.msra.mxu0 %v687
        %1693 = vmatprep.subr.bf16.mxu0 %v692
        %1694 = vmatpush1.bf16.msra.mxu0 %v691
        %1695 = vmatprep.subr.bf16.mxu0 %v696
        %1696 = vmatpush1.bf16.msra.mxu0 %v695
        %1697 = vmatprep.subr.bf16.mxu0 %v700
        %1698 = vmatpush1.bf16.msra.mxu0 %v699
        %1699 = vmatprep.subr.bf16.mxu0 %v704
        %1700 = vmatpush1.bf16.msra.mxu0 %v703
        %1701 = vmatprep.subr.bf16.mxu0 %v708
        %1702 = vmatpush1.bf16.msra.mxu0 %v707
        %1703 = vmatprep.subr.bf16.mxu0 %v712
        %1704 = vmatpush1.bf16.msra.mxu0 %v711
        %1705 = vmatprep.subr.bf16.mxu0 %v716
        %1706 = vmatpush1.bf16.msra.mxu0 %v715
        %1707 = vmatprep.subr.bf16.mxu0 0
        %1708 = vmatpush1.bf16.msra.mxu0 0
        %1709 = vmatprep.subr.bf16.mxu0 0
        %1710 = vmatpush1.bf16.msra.mxu0 0
        %1711 = vmatprep.subr.bf16.mxu0 0
        %1712 = vmatpush1.bf16.msra.mxu0 0
        %1713 = vmatprep.subr.bf16.mxu0 0
        %1714 = vmatpush1.bf16.msra.mxu0 0
        %1715 = vmatprep.subr.bf16.mxu0 0
        %1716 = vmatpush1.bf16.msra.mxu0 0
        %1717 = vmatprep.subr.bf16.mxu0 0
        %1718 = vmatpush1.bf16.msra.mxu0 0
        %1719 = vmatprep.subr.bf16.mxu0 0
        %1720 = vmatpush1.bf16.msra.mxu0 0
        %1721 = vmatprep.subr.bf16.mxu0 0
        %1722 = vmatpush1.bf16.msra.mxu0 0
        %1723 = vmatprep.mubr.bf16.mxu0 0
        %1724 = vmatmul.mubr.bf16.gmra.mrb[0].mxu0 %v1690
        %v1725 = vpop.f32.mrb[0].mxu0
        %v1726 = vadd.f32 0.0, %v1725
        %v1727 = vpop.f32.mrb[0].mxu0
        %v1728 = vadd.f32 0.0, %v1727
        %v1729 = vpop.f32.mrb[0].mxu0
        %v1730 = vadd.f32 0.0, %v1729
        %v1731 = vpop.f32.mrb[0].mxu0
        %v1732 = vadd.f32 0.0, %v1731
        %1733 = vdwg.mxu0
        %1734 = vmatprep.subr.bf16.mxu0 %v690
        %1735 = vmatpush1.bf16.msra.mxu0 %v689
        %1736 = vmatprep.subr.bf16.mxu0 %v694
        %1737 = vmatpush1.bf16.msra.mxu0 %v693
        %1738 = vmatprep.subr.bf16.mxu0 %v698
        %1739 = vmatpush1.bf16.msra.mxu0 %v697
        %1740 = vmatprep.subr.bf16.mxu0 %v702
        %1741 = vmatpush1.bf16.msra.mxu0 %v701
        %1742 = vmatprep.subr.bf16.mxu0 %v706
        %1743 = vmatpush1.bf16.msra.mxu0 %v705
        %1744 = vmatprep.subr.bf16.mxu0 %v710
        %1745 = vmatpush1.bf16.msra.mxu0 %v709
        %1746 = vmatprep.subr.bf16.mxu0 %v714
        %1747 = vmatpush1.bf16.msra.mxu0 %v713
        %1748 = vmatprep.subr.bf16.mxu0 %v718
        %1749 = vmatpush1.bf16.msra.mxu0 %v717
        %1750 = vmatprep.subr.bf16.mxu0 0
        %1751 = vmatpush1.bf16.msra.mxu0 0
        %1752 = vmatprep.subr.bf16.mxu0 0
        %1753 = vmatpush1.bf16.msra.mxu0 0
        %1754 = vmatprep.subr.bf16.mxu0 0
        %1755 = vmatpush1.bf16.msra.mxu0 0
        %1756 = vmatprep.subr.bf16.mxu0 0
        %1757 = vmatpush1.bf16.msra.mxu0 0
        %1758 = vmatprep.subr.bf16.mxu0 0
        %1759 = vmatpush1.bf16.msra.mxu0 0
        %1760 = vmatprep.subr.bf16.mxu0 0
        %1761 = vmatpush1.bf16.msra.mxu0 0
        %1762 = vmatprep.subr.bf16.mxu0 0
        %1763 = vmatpush1.bf16.msra.mxu0 0
        %1764 = vmatprep.subr.bf16.mxu0 0
        %1765 = vmatpush1.bf16.msra.mxu0 0
        %1766 = vmatprep.mubr.bf16.mxu0 0
        %1767 = vmatmul.mubr.bf16.gmra.mrb[0].mxu0 %v1690
        %v1768 = vpop.f32.mrb[0].mxu0
        %v1769 = vadd.f32 0.0, %v1768
        %v1770 = vpop.f32.mrb[0].mxu0
        %v1771 = vadd.f32 0.0, %v1770
        %v1772 = vpop.f32.mrb[0].mxu0
        %v1773 = vadd.f32 0.0, %v1772
        %v1774 = vpop.f32.mrb[0].mxu0
        %v1775 = vadd.f32 0.0, %v1774
        %1776 = vdwg.mxu0
        %v1779 = vunpack.c.l.b16 %v1688
        %v1780 = vunpack.c.l.b16 %v1689
        %v1781 = vpack.c.b16 %v1780, %v1779
        %1783 = vmatprep.subr.bf16.mxu0 %v940
        %1784 = vmatpush1.bf16.msra.mxu0 %v939
        %1785 = vmatprep.subr.bf16.mxu0 %v944
        %1786 = vmatpush1.bf16.msra.mxu0 %v943
        %1787 = vmatprep.subr.bf16.mxu0 %v948
        %1788 = vmatpush1.bf16.msra.mxu0 %v947
        %1789 = vmatprep.subr.bf16.mxu0 %v952
        %1790 = vmatpush1.bf16.msra.mxu0 %v951
        %1791 = vmatprep.subr.bf16.mxu0 %v956
        %1792 = vmatpush1.bf16.msra.mxu0 %v955
        %1793 = vmatprep.subr.bf16.mxu0 %v960
        %1794 = vmatpush1.bf16.msra.mxu0 %v959
        %1795 = vmatprep.subr.bf16.mxu0 %v964
        %1796 = vmatpush1.bf16.msra.mxu0 %v963
        %1797 = vmatprep.subr.bf16.mxu0 %v968
        %1798 = vmatpush1.bf16.msra.mxu0 %v967
        %1799 = vmatprep.subr.bf16.mxu0 0
        %1800 = vmatpush1.bf16.msra.mxu0 0
        %1801 = vmatprep.subr.bf16.mxu0 0
        %1802 = vmatpush1.bf16.msra.mxu0 0
        %1803 = vmatprep.subr.bf16.mxu0 0
        %1804 = vmatpush1.bf16.msra.mxu0 0
        %1805 = vmatprep.subr.bf16.mxu0 0
        %1806 = vmatpush1.bf16.msra.mxu0 0
        %1807 = vmatprep.subr.bf16.mxu0 0
        %1808 = vmatpush1.bf16.msra.mxu0 0
        %1809 = vmatprep.subr.bf16.mxu0 0
        %1810 = vmatpush1.bf16.msra.mxu0 0
        %1811 = vmatprep.subr.bf16.mxu0 0
        %1812 = vmatpush1.bf16.msra.mxu0 0
        %1813 = vmatprep.subr.bf16.mxu0 0
        %1814 = vmatpush1.bf16.msra.mxu0 0
        %1815 = vmatprep.mubr.bf16.mxu0 0
        %1816 = vmatmul.mubr.bf16.gmra.mrb[0].mxu0 %v1781
        %v1817 = vpop.f32.mrb[0].mxu0
        %v1818 = vadd.f32 %v1726, %v1817
        %v1819 = vpop.f32.mrb[0].mxu0
        %v1820 = vadd.f32 %v1728, %v1819
        %v1821 = vpop.f32.mrb[0].mxu0
        %v1822 = vadd.f32 %v1730, %v1821
        %v1823 = vpop.f32.mrb[0].mxu0
        %v1824 = vadd.f32 %v1732, %v1823
        %1825 = vdwg.mxu0
        %1826 = vmatprep.subr.bf16.mxu0 %v942
        %1827 = vmatpush1.bf16.msra.mxu0 %v941
        %1828 = vmatprep.subr.bf16.mxu0 %v946
        %1829 = vmatpush1.bf16.msra.mxu0 %v945
        %1830 = vmatprep.subr.bf16.mxu0 %v950
        %1831 = vmatpush1.bf16.msra.mxu0 %v949
        %1832 = vmatprep.subr.bf16.mxu0 %v954
        %1833 = vmatpush1.bf16.msra.mxu0 %v953
        %1834 = vmatprep.subr.bf16.mxu0 %v958
        %1835 = vmatpush1.bf16.msra.mxu0 %v957
        %1836 = vmatprep.subr.bf16.mxu0 %v962
        %1837 = vmatpush1.bf16.msra.mxu0 %v961
        %1838 = vmatprep.subr.bf16.mxu0 %v966
        %1839 = vmatpush1.bf16.msra.mxu0 %v965
        %1840 = vmatprep.subr.bf16.mxu0 %v970
        %1841 = vmatpush1.bf16.msra.mxu0 %v969
        %1842 = vmatprep.subr.bf16.mxu0 0
        %1843 = vmatpush1.bf16.msra.mxu0 0
        %1844 = vmatprep.subr.bf16.mxu0 0
        %1845 = vmatpush1.bf16.msra.mxu0 0
        %1846 = vmatprep.subr.bf16.mxu0 0
        %1847 = vmatpush1.bf16.msra.mxu0 0
        %1848 = vmatprep.subr.bf16.mxu0 0
        %1849 = vmatpush1.bf16.msra.mxu0 0
        %1850 = vmatprep.subr.bf16.mxu0 0
        %1851 = vmatpush1.bf16.msra.mxu0 0
        %1852 = vmatprep.subr.bf16.mxu0 0
        %1853 = vmatpush1.bf16.msra.mxu0 0
        %1854 = vmatprep.subr.bf16.mxu0 0
        %1855 = vmatpush1.bf16.msra.mxu0 0
        %1856 = vmatprep.subr.bf16.mxu0 0
        %1857 = vmatpush1.bf16.msra.mxu0 0
        %1858 = vmatprep.mubr.bf16.mxu0 0
        %1859 = vmatmul.mubr.bf16.gmra.mrb[0].mxu0 %v1781
        %v1860 = vpop.f32.mrb[0].mxu0
        %v1861 = vadd.f32 %v1769, %v1860
        %v1862 = vpop.f32.mrb[0].mxu0
        %v1863 = vadd.f32 %v1771, %v1862
        %v1864 = vpop.f32.mrb[0].mxu0
        %v1865 = vadd.f32 %v1773, %v1864
        %v1866 = vpop.f32.mrb[0].mxu0
        %v1867 = vadd.f32 %v1775, %v1866
        %1868 = vdwg.mxu0
        %v1869 = vadd.f32 %v1818, %v1093
        %v1870 = vadd.f32 %v1820, %v1097
        %v1871 = vadd.f32 %v1861, %v1101
        %v1872 = vadd.f32 %v1863, %v1105
        %v1873 = vadd.f32 %v1822, %v1093
        %v1874 = vadd.f32 %v1824, %v1097
        %v1875 = vadd.f32 %v1865, %v1101
        %v1876 = vadd.f32 %v1867, %v1105
        %1877 = vmatprep.subr.bf16.mxu0 %v1168
        %1878 = vmatpush1.bf16.msra.mxu0 %v1167
        %1879 = vmatprep.subr.bf16.mxu0 %v1170
        %1880 = vmatpush1.bf16.msra.mxu0 %v1169
        %1881 = vmatprep.subr.bf16.mxu0 %v1172
        %1882 = vmatpush1.bf16.msra.mxu0 %v1171
        %1883 = vmatprep.subr.bf16.mxu0 %v1174
        %1884 = vmatpush1.bf16.msra.mxu0 %v1173
        %1885 = vmatprep.subr.bf16.mxu0 %v1176
        %1886 = vmatpush1.bf16.msra.mxu0 %v1175
        %1887 = vmatprep.subr.bf16.mxu0 %v1178
        %1888 = vmatpush1.bf16.msra.mxu0 %v1177
        %1889 = vmatprep.subr.bf16.mxu0 %v1180
        %1890 = vmatpush1.bf16.msra.mxu0 %v1179
        %1891 = vmatprep.subr.bf16.mxu0 %v1182
        %1892 = vmatpush1.bf16.msra.mxu0 %v1181
        %1893 = vmatprep.subr.bf16.mxu0 0
        %1894 = vmatpush1.bf16.msra.mxu0 0
        %1895 = vmatprep.subr.bf16.mxu0 0
        %1896 = vmatpush1.bf16.msra.mxu0 0
        %1897 = vmatprep.subr.bf16.mxu0 0
        %1898 = vmatpush1.bf16.msra.mxu0 0
        %1899 = vmatprep.subr.bf16.mxu0 0
        %1900 = vmatpush1.bf16.msra.mxu0 0
        %1901 = vmatprep.subr.bf16.mxu0 0
        %1902 = vmatpush1.bf16.msra.mxu0 0
        %1903 = vmatprep.subr.bf16.mxu0 0
        %1904 = vmatpush1.bf16.msra.mxu0 0
        %1905 = vmatprep.subr.bf16.mxu0 0
        %1906 = vmatpush1.bf16.msra.mxu0 0
        %1907 = vmatprep.subr.bf16.mxu0 0
        %1908 = vmatpush1.bf16.msra.mxu0 0
        %1909 = vmatprep.mubr.bf16.mxu0 0
        %1910 = vmatmul.mubr.bf16.gmra.mrb[0].mxu0 %v1633
        %v1911 = vpop.f32.mrb[0].mxu0
        %v1912 = vadd.f32 0.0, %v1911
        %v1913 = vpop.f32.mrb[0].mxu0
        %v1914 = vadd.f32 0.0, %v1913
        %v1915 = vpop.f32.mrb[0].mxu0
        %v1916 = vadd.f32 0.0, %v1915
        %v1917 = vpop.f32.mrb[0].mxu0
        %v1918 = vadd.f32 0.0, %v1917
        %1919 = vdwg.mxu0
        %v1920 = vadd.f32 %v1869, %v1912
        %v1921 = vadd.f32 %v1873, %v1916
        %v1922 = vmul.f32 %v1920, 0.5
        %v1923 = vmul.f32 %v1921, 0.5
        %v1924 = vtanh.pop %v1922
        %v1925 = vtanh.pop %v1923
        %v1926 = vmul.f32 %v1924, 0.5
        %v1927 = vmul.f32 %v1925, 0.5
        %v1928 = vadd.f32 %v1926, 0.5
        %v1929 = vadd.f32 %v1927, 0.5
        %v1930 = vadd.f32 %v1870, %v1914
        %v1931 = vadd.f32 %v1874, %v1918
        %v1932 = vmul.f32 %v1930, 0.5
        %v1933 = vmul.f32 %v1931, 0.5
        %v1934 = vtanh.pop %v1932
        %v1935 = vtanh.pop %v1933
        %v1936 = vmul.f32 %v1934, 0.5
        %v1937 = vmul.f32 %v1935, 0.5
        %v1938 = vadd.f32 %v1936, 0.5
        %v1939 = vadd.f32 %v1937, 0.5
        %v1940 = vtanh.pop %v1872
        %v1941 = vtanh.pop %v1876
        %v1942 = vmul.f32 %v1938, %v1631
        %v1943 = vmul.f32 %v1939, %v1632
        %v1944 = vmul.f32 %v1928, %v1940
        %v1945 = vmul.f32 %v1929, %v1941
        %v1946 = vadd.f32 %v1942, %v1944
        %v1947 = vadd.f32 %v1943, %v1945
        %v1948 = vpack.c.bf16 %v1947, %v1946
        %1949 = vmatprep.subr.bf16.mxu0 0
        %1950 = vmatpush1.bf16.msra.mxu0 %v1303
        %1951 = vmatprep.subr.bf16.mxu0 0
        %1952 = vmatpush1.bf16.msra.mxu0 %v1304
        %1953 = vmatprep.subr.bf16.mxu0 0
        %1954 = vmatpush1.bf16.msra.mxu0 %v1305
        %1955 = vmatprep.subr.bf16.mxu0 0
        %1956 = vmatpush1.bf16.msra.mxu0 %v1306
        %1957 = vmatprep.subr.bf16.mxu0 0
        %1958 = vmatpush1.bf16.msra.mxu0 %v1307
        %1959 = vmatprep.subr.bf16.mxu0 0
        %1960 = vmatpush1.bf16.msra.mxu0 %v1308
        %1961 = vmatprep.subr.bf16.mxu0 0
        %1962 = vmatpush1.bf16.msra.mxu0 %v1309
        %1963 = vmatprep.subr.bf16.mxu0 0
        %1964 = vmatpush1.bf16.msra.mxu0 %v1310
        %1965 = vmatprep.subr.bf16.mxu0 0
        %1966 = vmatpush1.bf16.msra.mxu0 0
        %1967 = vmatprep.subr.bf16.mxu0 0
        %1968 = vmatpush1.bf16.msra.mxu0 0
        %1969 = vmatprep.subr.bf16.mxu0 0
        %1970 = vmatpush1.bf16.msra.mxu0 0
        %1971 = vmatprep.subr.bf16.mxu0 0
        %1972 = vmatpush1.bf16.msra.mxu0 0
        %1973 = vmatprep.subr.bf16.mxu0 0
        %1974 = vmatpush1.bf16.msra.mxu0 0
        %1975 = vmatprep.subr.bf16.mxu0 0
        %1976 = vmatpush1.bf16.msra.mxu0 0
        %1977 = vmatprep.subr.bf16.mxu0 0
        %1978 = vmatpush1.bf16.msra.mxu0 0
        %1979 = vmatprep.subr.bf16.mxu0 0
        %1980 = vmatpush1.bf16.msra.mxu0 0
        %1981 = vmatprep.mubr.bf16.mxu0 0
        %1982 = vmatmul.mubr.bf16.gmra.mrb[0].mxu0 %v1948
        %v1983 = vpop.f32.mrb[0].mxu0
        %v1984 = vadd.f32 0.0, %v1983
        %v1985 = vpop.f32.mrb[0].mxu0
        %v1986 = vpop.f32.mrb[0].mxu0
        %v1987 = vadd.f32 0.0, %v1986
        %v1988 = vpop.f32.mrb[0].mxu0
        %1989 = vdwg.mxu0
        %v1990 = vadd.f32 %v1871, %v1984
        %v1991 = vadd.f32 %v1875, %v1987
        %v1992 = vmul.f32 %v1990, 0.5
        %v1993 = vmul.f32 %v1991, 0.5
        %v1994 = vtanh.pop %v1992
        %v1995 = vtanh.pop %v1993
        %v1996 = vmul.f32 %v1994, 0.5
        %v1997 = vmul.f32 %v1995, 0.5
        %v1998 = vadd.f32 %v1996, 0.5
        %v1999 = vadd.f32 %v1997, 0.5
        %v2000 = vmul.f32 %v1998, %v1946
        %v2001 = vmul.f32 %v1999, %v1947
        %s2002 = scalar_lea.vmem %s414, 24 [#allocation4]
        %v2003 = vld [vmem:[%s2002] sm:$0xf]
        %v2004 = vld [vmem:[%s2002 + $0x4] sm:$0xf]
        %v2005 = vpack.c.bf16 %v2001, %v2000
        %2006 = vmatprep.subr.bf16.mxu0 %v688
        %2007 = vmatpush1.bf16.msra.mxu0 %v687
        %2008 = vmatprep.subr.bf16.mxu0 %v692
        %2009 = vmatpush1.bf16.msra.mxu0 %v691
        %2010 = vmatprep.subr.bf16.mxu0 %v696
        %2011 = vmatpush1.bf16.msra.mxu0 %v695
        %2012 = vmatprep.subr.bf16.mxu0 %v700
        %2013 = vmatpush1.bf16.msra.mxu0 %v699
        %2014 = vmatprep.subr.bf16.mxu0 %v704
        %2015 = vmatpush1.bf16.msra.mxu0 %v703
        %2016 = vmatprep.subr.bf16.mxu0 %v708
        %2017 = vmatpush1.bf16.msra.mxu0 %v707
        %2018 = vmatprep.subr.bf16.mxu0 %v712
        %2019 = vmatpush1.bf16.msra.mxu0 %v711
        %2020 = vmatprep.subr.bf16.mxu0 %v716
        %2021 = vmatpush1.bf16.msra.mxu0 %v715
        %2022 = vmatprep.subr.bf16.mxu0 0
        %2023 = vmatpush1.bf16.msra.mxu0 0
        %2024 = vmatprep.subr.bf16.mxu0 0
        %2025 = vmatpush1.bf16.msra.mxu0 0
        %2026 = vmatprep.subr.bf16.mxu0 0
        %2027 = vmatpush1.bf16.msra.mxu0 0
        %2028 = vmatprep.subr.bf16.mxu0 0
        %2029 = vmatpush1.bf16.msra.mxu0 0
        %2030 = vmatprep.subr.bf16.mxu0 0
        %2031 = vmatpush1.bf16.msra.mxu0 0
        %2032 = vmatprep.subr.bf16.mxu0 0
        %2033 = vmatpush1.bf16.msra.mxu0 0
        %2034 = vmatprep.subr.bf16.mxu0 0
        %2035 = vmatpush1.bf16.msra.mxu0 0
        %2036 = vmatprep.subr.bf16.mxu0 0
        %2037 = vmatpush1.bf16.msra.mxu0 0
        %2038 = vmatprep.mubr.bf16.mxu0 0
        %2039 = vmatmul.mubr.bf16.gmra.mrb[0].mxu0 %v2005
        %v2040 = vpop.f32.mrb[0].mxu0
        %v2041 = vadd.f32 0.0, %v2040
        %v2042 = vpop.f32.mrb[0].mxu0
        %v2043 = vadd.f32 0.0, %v2042
        %v2044 = vpop.f32.mrb[0].mxu0
        %v2045 = vadd.f32 0.0, %v2044
        %v2046 = vpop.f32.mrb[0].mxu0
        %v2047 = vadd.f32 0.0, %v2046
        %2048 = vdwg.mxu0
        %2049 = vmatprep.subr.bf16.mxu0 %v690
        %2050 = vmatpush1.bf16.msra.mxu0 %v689
        %2051 = vmatprep.subr.bf16.mxu0 %v694
        %2052 = vmatpush1.bf16.msra.mxu0 %v693
        %2053 = vmatprep.subr.bf16.mxu0 %v698
        %2054 = vmatpush1.bf16.msra.mxu0 %v697
        %2055 = vmatprep.subr.bf16.mxu0 %v702
        %2056 = vmatpush1.bf16.msra.mxu0 %v701
        %2057 = vmatprep.subr.bf16.mxu0 %v706
        %2058 = vmatpush1.bf16.msra.mxu0 %v705
        %2059 = vmatprep.subr.bf16.mxu0 %v710
        %2060 = vmatpush1.bf16.msra.mxu0 %v709
        %2061 = vmatprep.subr.bf16.mxu0 %v714
        %2062 = vmatpush1.bf16.msra.mxu0 %v713
        %2063 = vmatprep.subr.bf16.mxu0 %v718
        %2064 = vmatpush1.bf16.msra.mxu0 %v717
        %2065 = vmatprep.subr.bf16.mxu0 0
        %2066 = vmatpush1.bf16.msra.mxu0 0
        %2067 = vmatprep.subr.bf16.mxu0 0
        %2068 = vmatpush1.bf16.msra.mxu0 0
        %2069 = vmatprep.subr.bf16.mxu0 0
        %2070 = vmatpush1.bf16.msra.mxu0 0
        %2071 = vmatprep.subr.bf16.mxu0 0
        %2072 = vmatpush1.bf16.msra.mxu0 0
        %2073 = vmatprep.subr.bf16.mxu0 0
        %2074 = vmatpush1.bf16.msra.mxu0 0
        %2075 = vmatprep.subr.bf16.mxu0 0
        %2076 = vmatpush1.bf16.msra.mxu0 0
        %2077 = vmatprep.subr.bf16.mxu0 0
        %2078 = vmatpush1.bf16.msra.mxu0 0
        %2079 = vmatprep.subr.bf16.mxu0 0
        %2080 = vmatpush1.bf16.msra.mxu0 0
        %2081 = vmatprep.mubr.bf16.mxu0 0
        %2082 = vmatmul.mubr.bf16.gmra.mrb[0].mxu0 %v2005
        %v2083 = vpop.f32.mrb[0].mxu0
        %v2084 = vadd.f32 0.0, %v2083
        %v2085 = vpop.f32.mrb[0].mxu0
        %v2086 = vadd.f32 0.0, %v2085
        %v2087 = vpop.f32.mrb[0].mxu0
        %v2088 = vadd.f32 0.0, %v2087
        %v2089 = vpop.f32.mrb[0].mxu0
        %v2090 = vadd.f32 0.0, %v2089
        %2091 = vdwg.mxu0
        %v2094 = vunpack.c.l.b16 %v2003
        %v2095 = vunpack.c.l.b16 %v2004
        %v2096 = vpack.c.b16 %v2095, %v2094
        %2098 = vmatprep.subr.bf16.mxu0 %v940
        %2099 = vmatpush1.bf16.msra.mxu0 %v939
        %2100 = vmatprep.subr.bf16.mxu0 %v944
        %2101 = vmatpush1.bf16.msra.mxu0 %v943
        %2102 = vmatprep.subr.bf16.mxu0 %v948
        %2103 = vmatpush1.bf16.msra.mxu0 %v947
        %2104 = vmatprep.subr.bf16.mxu0 %v952
        %2105 = vmatpush1.bf16.msra.mxu0 %v951
        %2106 = vmatprep.subr.bf16.mxu0 %v956
        %2107 = vmatpush1.bf16.msra.mxu0 %v955
        %2108 = vmatprep.subr.bf16.mxu0 %v960
        %2109 = vmatpush1.bf16.msra.mxu0 %v959
        %2110 = vmatprep.subr.bf16.mxu0 %v964
        %2111 = vmatpush1.bf16.msra.mxu0 %v963
        %2112 = vmatprep.subr.bf16.mxu0 %v968
        %2113 = vmatpush1.bf16.msra.mxu0 %v967
        %2114 = vmatprep.subr.bf16.mxu0 0
        %2115 = vmatpush1.bf16.msra.mxu0 0
        %2116 = vmatprep.subr.bf16.mxu0 0
        %2117 = vmatpush1.bf16.msra.mxu0 0
        %2118 = vmatprep.subr.bf16.mxu0 0
        %2119 = vmatpush1.bf16.msra.mxu0 0
        %2120 = vmatprep.subr.bf16.mxu0 0
        %2121 = vmatpush1.bf16.msra.mxu0 0
        %2122 = vmatprep.subr.bf16.mxu0 0
        %2123 = vmatpush1.bf16.msra.mxu0 0
        %2124 = vmatprep.subr.bf16.mxu0 0
        %2125 = vmatpush1.bf16.msra.mxu0 0
        %2126 = vmatprep.subr.bf16.mxu0 0
        %2127 = vmatpush1.bf16.msra.mxu0 0
        %2128 = vmatprep.subr.bf16.mxu0 0
        %2129 = vmatpush1.bf16.msra.mxu0 0
        %2130 = vmatprep.mubr.bf16.mxu0 0
        %2131 = vmatmul.mubr.bf16.gmra.mrb[0].mxu0 %v2096
        %v2132 = vpop.f32.mrb[0].mxu0
        %v2133 = vadd.f32 %v2041, %v2132
        %v2134 = vpop.f32.mrb[0].mxu0
        %v2135 = vadd.f32 %v2043, %v2134
        %v2136 = vpop.f32.mrb[0].mxu0
        %v2137 = vadd.f32 %v2045, %v2136
        %v2138 = vpop.f32.mrb[0].mxu0
        %v2139 = vadd.f32 %v2047, %v2138
        %2140 = vdwg.mxu0
        %2141 = vmatprep.subr.bf16.mxu0 %v942
        %2142 = vmatpush1.bf16.msra.mxu0 %v941
        %2143 = vmatprep.subr.bf16.mxu0 %v946
        %2144 = vmatpush1.bf16.msra.mxu0 %v945
        %2145 = vmatprep.subr.bf16.mxu0 %v950
        %2146 = vmatpush1.bf16.msra.mxu0 %v949
        %2147 = vmatprep.subr.bf16.mxu0 %v954
        %2148 = vmatpush1.bf16.msra.mxu0 %v953
        %2149 = vmatprep.subr.bf16.mxu0 %v958
        %2150 = vmatpush1.bf16.msra.mxu0 %v957
        %2151 = vmatprep.subr.bf16.mxu0 %v962
        %2152 = vmatpush1.bf16.msra.mxu0 %v961
        %2153 = vmatprep.subr.bf16.mxu0 %v966
        %2154 = vmatpush1.bf16.msra.mxu0 %v965
        %2155 = vmatprep.subr.bf16.mxu0 %v970
        %2156 = vmatpush1.bf16.msra.mxu0 %v969
        %2157 = vmatprep.subr.bf16.mxu0 0
        %2158 = vmatpush1.bf16.msra.mxu0 0
        %2159 = vmatprep.subr.bf16.mxu0 0
        %2160 = vmatpush1.bf16.msra.mxu0 0
        %2161 = vmatprep.subr.bf16.mxu0 0
        %2162 = vmatpush1.bf16.msra.mxu0 0
        %2163 = vmatprep.subr.bf16.mxu0 0
        %2164 = vmatpush1.bf16.msra.mxu0 0
        %2165 = vmatprep.subr.bf16.mxu0 0
        %2166 = vmatpush1.bf16.msra.mxu0 0
        %2167 = vmatprep.subr.bf16.mxu0 0
        %2168 = vmatpush1.bf16.msra.mxu0 0
        %2169 = vmatprep.subr.bf16.mxu0 0
        %2170 = vmatpush1.bf16.msra.mxu0 0
        %2171 = vmatprep.subr.bf16.mxu0 0
        %2172 = vmatpush1.bf16.msra.mxu0 0
        %2173 = vmatprep.mubr.bf16.mxu0 0
        %2174 = vmatmul.mubr.bf16.gmra.mrb[0].mxu0 %v2096
        %v2175 = vpop.f32.mrb[0].mxu0
        %v2176 = vadd.f32 %v2084, %v2175
        %v2177 = vpop.f32.mrb[0].mxu0
        %v2178 = vadd.f32 %v2086, %v2177
        %v2179 = vpop.f32.mrb[0].mxu0
        %v2180 = vadd.f32 %v2088, %v2179
        %v2181 = vpop.f32.mrb[0].mxu0
        %v2182 = vadd.f32 %v2090, %v2181
        %2183 = vdwg.mxu0
        %v2184 = vadd.f32 %v2133, %v1093
        %v2185 = vadd.f32 %v2135, %v1097
        %v2186 = vadd.f32 %v2176, %v1101
        %v2187 = vadd.f32 %v2178, %v1105
        %v2188 = vadd.f32 %v2137, %v1093
        %v2189 = vadd.f32 %v2139, %v1097
        %v2190 = vadd.f32 %v2180, %v1101
        %v2191 = vadd.f32 %v2182, %v1105
        %2192 = vmatprep.subr.bf16.mxu0 %v1168
        %2193 = vmatpush1.bf16.msra.mxu0 %v1167
        %2194 = vmatprep.subr.bf16.mxu0 %v1170
        %2195 = vmatpush1.bf16.msra.mxu0 %v1169
        %2196 = vmatprep.subr.bf16.mxu0 %v1172
        %2197 = vmatpush1.bf16.msra.mxu0 %v1171
        %2198 = vmatprep.subr.bf16.mxu0 %v1174
        %2199 = vmatpush1.bf16.msra.mxu0 %v1173
        %2200 = vmatprep.subr.bf16.mxu0 %v1176
        %2201 = vmatpush1.bf16.msra.mxu0 %v1175
        %2202 = vmatprep.subr.bf16.mxu0 %v1178
        %2203 = vmatpush1.bf16.msra.mxu0 %v1177
        %2204 = vmatprep.subr.bf16.mxu0 %v1180
        %2205 = vmatpush1.bf16.msra.mxu0 %v1179
        %2206 = vmatprep.subr.bf16.mxu0 %v1182
        %2207 = vmatpush1.bf16.msra.mxu0 %v1181
        %2208 = vmatprep.subr.bf16.mxu0 0
        %2209 = vmatpush1.bf16.msra.mxu0 0
        %2210 = vmatprep.subr.bf16.mxu0 0
        %2211 = vmatpush1.bf16.msra.mxu0 0
        %2212 = vmatprep.subr.bf16.mxu0 0
        %2213 = vmatpush1.bf16.msra.mxu0 0
        %2214 = vmatprep.subr.bf16.mxu0 0
        %2215 = vmatpush1.bf16.msra.mxu0 0
        %2216 = vmatprep.subr.bf16.mxu0 0
        %2217 = vmatpush1.bf16.msra.mxu0 0
        %2218 = vmatprep.subr.bf16.mxu0 0
        %2219 = vmatpush1.bf16.msra.mxu0 0
        %2220 = vmatprep.subr.bf16.mxu0 0
        %2221 = vmatpush1.bf16.msra.mxu0 0
        %2222 = vmatprep.subr.bf16.mxu0 0
        %2223 = vmatpush1.bf16.msra.mxu0 0
        %2224 = vmatprep.mubr.bf16.mxu0 0
        %2225 = vmatmul.mubr.bf16.gmra.mrb[0].mxu0 %v1948
        %v2226 = vpop.f32.mrb[0].mxu0
        %v2227 = vadd.f32 0.0, %v2226
        %v2228 = vpop.f32.mrb[0].mxu0
        %v2229 = vadd.f32 0.0, %v2228
        %v2230 = vpop.f32.mrb[0].mxu0
        %v2231 = vadd.f32 0.0, %v2230
        %v2232 = vpop.f32.mrb[0].mxu0
        %v2233 = vadd.f32 0.0, %v2232
        %2234 = vdwg.mxu0
        %v2235 = vadd.f32 %v2184, %v2227
        %v2236 = vadd.f32 %v2188, %v2231
        %v2237 = vmul.f32 %v2235, 0.5
        %v2238 = vmul.f32 %v2236, 0.5
        %v2239 = vtanh.pop %v2237
        %v2240 = vtanh.pop %v2238
        %v2241 = vmul.f32 %v2239, 0.5
        %v2242 = vmul.f32 %v2240, 0.5
        %v2243 = vadd.f32 %v2241, 0.5
        %v2244 = vadd.f32 %v2242, 0.5
        %v2245 = vadd.f32 %v2185, %v2229
        %v2246 = vadd.f32 %v2189, %v2233
        %v2247 = vmul.f32 %v2245, 0.5
        %v2248 = vmul.f32 %v2246, 0.5
        %v2249 = vtanh.pop %v2247
        %v2250 = vtanh.pop %v2248
        %v2251 = vmul.f32 %v2249, 0.5
        %v2252 = vmul.f32 %v2250, 0.5
        %v2253 = vadd.f32 %v2251, 0.5
        %v2254 = vadd.f32 %v2252, 0.5
        %v2255 = vtanh.pop %v2187
        %v2256 = vtanh.pop %v2191
        %v2257 = vmul.f32 %v2253, %v1946
        %v2258 = vmul.f32 %v2254, %v1947
        %v2259 = vmul.f32 %v2243, %v2255
        %v2260 = vmul.f32 %v2244, %v2256
        %v2261 = vadd.f32 %v2257, %v2259
        %v2262 = vadd.f32 %v2258, %v2260
        %v2263 = vpack.c.bf16 %v2262, %v2261
        %2264 = vmatprep.subr.bf16.mxu0 0
        %2265 = vmatpush1.bf16.msra.mxu0 %v1303
        %2266 = vmatprep.subr.bf16.mxu0 0
        %2267 = vmatpush1.bf16.msra.mxu0 %v1304
        %2268 = vmatprep.subr.bf16.mxu0 0
        %2269 = vmatpush1.bf16.msra.mxu0 %v1305
        %2270 = vmatprep.subr.bf16.mxu0 0
        %2271 = vmatpush1.bf16.msra.mxu0 %v1306
        %2272 = vmatprep.subr.bf16.mxu0 0
        %2273 = vmatpush1.bf16.msra.mxu0 %v1307
        %2274 = vmatprep.subr.bf16.mxu0 0
        %2275 = vmatpush1.bf16.msra.mxu0 %v1308
        %2276 = vmatprep.subr.bf16.mxu0 0
        %2277 = vmatpush1.bf16.msra.mxu0 %v1309
        %2278 = vmatprep.subr.bf16.mxu0 0
        %2279 = vmatpush1.bf16.msra.mxu0 %v1310
        %2280 = vmatprep.subr.bf16.mxu0 0
        %2281 = vmatpush1.bf16.msra.mxu0 0
        %2282 = vmatprep.subr.bf16.mxu0 0
        %2283 = vmatpush1.bf16.msra.mxu0 0
        %2284 = vmatprep.subr.bf16.mxu0 0
        %2285 = vmatpush1.bf16.msra.mxu0 0
        %2286 = vmatprep.subr.bf16.mxu0 0
        %2287 = vmatpush1.bf16.msra.mxu0 0
        %2288 = vmatprep.subr.bf16.mxu0 0
        %2289 = vmatpush1.bf16.msra.mxu0 0
        %2290 = vmatprep.subr.bf16.mxu0 0
        %2291 = vmatpush1.bf16.msra.mxu0 0
        %2292 = vmatprep.subr.bf16.mxu0 0
        %2293 = vmatpush1.bf16.msra.mxu0 0
        %2294 = vmatprep.subr.bf16.mxu0 0
        %2295 = vmatpush1.bf16.msra.mxu0 0
        %2296 = vmatprep.mubr.bf16.mxu0 0
        %2297 = vmatmul.mubr.bf16.gmra.mrb[0].mxu0 %v2263
        %v2298 = vpop.f32.mrb[0].mxu0
        %v2299 = vadd.f32 0.0, %v2298
        %v2300 = vpop.f32.mrb[0].mxu0
        %v2301 = vpop.f32.mrb[0].mxu0
        %v2302 = vadd.f32 0.0, %v2301
        %v2303 = vpop.f32.mrb[0].mxu0
        %2304 = vdwg.mxu0
        %v2305 = vadd.f32 %v2186, %v2299
        %v2306 = vadd.f32 %v2190, %v2302
        %v2307 = vmul.f32 %v2305, 0.5
        %v2308 = vmul.f32 %v2306, 0.5
        %v2309 = vtanh.pop %v2307
        %v2310 = vtanh.pop %v2308
        %v2311 = vmul.f32 %v2309, 0.5
        %v2312 = vmul.f32 %v2310, 0.5
        %v2313 = vadd.f32 %v2311, 0.5
        %v2314 = vadd.f32 %v2312, 0.5
        %v2315 = vmul.f32 %v2313, %v2261
        %v2316 = vmul.f32 %v2314, %v2262
        %2317 = vst [vmem:[#allocation2] sm:$0xff] %v2315
        %2318 = vst [vmem:[#allocation2 + $0x8] sm:$0xff] %v2316
        %2319 = vst [vmem:[#allocation3] sm:$0xff] %v2261
        %2320 = vst [vmem:[#allocation3 + $0x8] sm:$0xff] %v2262
        %p2321 = scmp.eq.s32.totalorder %s34, 1
        // Predicated region
        $region85: #{tpu_custom_call.1} parent=51 // pred_check
          %p2322 = pneg %p2321
        $region86: #{tpu_custom_call.1} parent=51 // pred_check_branch
          %2324 = sbr.rel (%p2322) target = $region88
        $region87: #{tpu_custom_call.1} parent=51 // pred_region
          %2325 = vst [vmem:[#allocation16] sm:$0xff] %v2315
          %2326 = vst [vmem:[#allocation16 + $0x8] sm:$0xff] %v2316
          %2327 = vst [vmem:[#allocation17] sm:$0xff] %v2261
          %2328 = vst [vmem:[#allocation17 + $0x8] sm:$0xff] %v2262
        $region88: #{tpu_custom_call.1} parent=51 // pred_fallthru
          _
        // Predicated region
        $region89: #{tpu_custom_call.1} parent=51 // pred_check
          %p2329 = pneg %p244
        $region90: #{tpu_custom_call.1} parent=51 // pred_check_branch
          %2331 = sbr.rel (%p2329) target = $region92
        $region91: #{tpu_custom_call.1} parent=51 // pred_region
          %s2332 = smul.u32 2, %s33
          %s2334 = ssub.s32 256, 256
          %2335 = vsyncadd [#allocation6], %s2334
          %s2336 = smul.addr %s2332, 128
          %s2337 = scalar_lea.hbm %s8, %s2336
          %s2338 = sshll.u32 [#allocation16], 4
          %s2339 = int_to_ptr.vmem [resolvable:$true] %s2338
          %2344 = dma.vmem_to_hbm [thread:$0]  %s2339, 256, %s2337, [#allocation6], 128, 128, 8
        $region92: #{tpu_custom_call.1} parent=51 // pred_fallthru
          _
        // Predicated region
        $region93: #{tpu_custom_call.1} parent=51 // pred_check
          %p2345 = pneg %p270
        $region94: #{tpu_custom_call.1} parent=51 // pred_check_branch
          %2347 = sbr.rel (%p2345) target = $region96
        $region95: #{tpu_custom_call.1} parent=51 // pred_region
          %s2348 = smul.u32 2, %s33
          %s2350 = ssub.s32 256, 256
          %2351 = vsyncadd [#allocation18], %s2350
          %s2352 = smul.addr %s2348, 128
          %s2353 = scalar_lea.hbm %s9, %s2352
          %s2354 = sshll.u32 [#allocation17], 4
          %s2355 = int_to_ptr.vmem [resolvable:$true] %s2354
          %2360 = dma.vmem_to_hbm [thread:$0]  %s2355, 256, %s2353, [#allocation18], 128, 128, 8
        $region96: #{tpu_custom_call.1} parent=51 // pred_fallthru
          _
        // Predicated region
        $region97: #{tpu_custom_call.1} parent=51 // pred_check
          %p2361 = pneg %p244
        $region98: #{tpu_custom_call.1} parent=51 // pred_check_branch
          %2363 = sbr.rel (%p2361) target = $region100
        $region99: #{tpu_custom_call.1} parent=51 // pred_region
          %2364 = dma.done [#allocation6], 256
        $region100: #{tpu_custom_call.1} parent=51 // pred_fallthru
          _
        // Predicated region
        $region101: #{tpu_custom_call.1} parent=51 // pred_check
          %p2365 = pneg %p270
        $region102: #{tpu_custom_call.1} parent=51 // pred_check_branch
          %2367 = sbr.rel (%p2365) target = $region104
        $region103: #{tpu_custom_call.1} parent=51 // pred_region
          %2368 = dma.done [#allocation18], 256
        $region104: #{tpu_custom_call.1} parent=51 // pred_fallthru
          _
      $region52: #{tpu_custom_call.1} parent=5 // pred_fallthru
        _
      %p2369 = scmp.le.s32.totalorder 2, %s24
      // Predicated region
      $region105: #{tpu_custom_call.1} parent=5 // pred_check
        %p2370 = pneg %p2369
      $region106: #{tpu_custom_call.1} parent=5 // pred_check_branch
        %2372 = sbr.rel (%p2370) target = $region108
      $region107: #{tpu_custom_call.1} parent=5 // pred_region
        %s2373 = ssub.s32 %s24, 2
      $region108: #{tpu_custom_call.1} parent=5 // pred_fallthru
        _
    $region6: #{tpu_custom_call.1} parent=1 // loop_footer
      %s28 = sadd.s32 1, %s24
    $region7: #{tpu_custom_call.1} parent=1 // loop_footer_branch
      %23 = sbr.rel target = $region3
    $region8: #{tpu_custom_call.1} parent=1 // loop_exit
      _
    %2374 = vsyncpa [#allocation5], 1
    %s2375 = scalar_lea.sflag [#allocation5], 1
    %2376 = vsyncpa %s2375, 1
    %2377 = vsyncpa [#allocation8], 1
    %2378 = vsyncpa [#allocation11], 1
    %2379 = vsyncpa [#allocation14], 1
    %2380 = vsyncpa [#allocation6], 1
    %s2381 = scalar_lea.sflag [#allocation6], 1
    %2382 = vsyncpa %s2381, 1
    %2383 = vsyncpa [#allocation18], 1

</llo_original>
